<compile_context>
chip_gen: v7x
topology: tpu7x:2x2x1
jax: 0.10.0
libtpu: 0.0.40
codegen_flags: <defaults>
</compile_context>

<pallas_src>
import jax
import jax.numpy as jnp
from jax import lax
from jax.experimental import pallas as pl
from jax.experimental.pallas import tpu as pltpu

# ------------------------- static configuration -------------------------
SB = 2              # batch of objects
NS = 2              # source views per object (num_views_per_obj)
B = 128             # points per object (rays * samples)
C_LAT = 32          # encoder latent channels (d_latent)
D_IN = 1            # -z_cam feature (use_xyz=False, normalize_z=True)
D_OUT = 4
D_OUT_PAD = 8       # sublane-padded output rows (rows 4..7 unused)
D_HID = 64          # ResnetFC hidden width
N_BLOCKS = 3
COMBINE_LAYER = 2   # average over NS views before this block
N_COMB = min(COMBINE_LAYER, N_BLOCKS)   # number of lin_z layers
HL, WL = 8, 8       # encoder latent feature-map spatial size
HW = HL * WL
IMG_H, IMG_W = 16, 16

# packed weight slab: 128-lane-aligned blocks [wz_0..  w0_0..  w1_0..  wout]
W0_BLK = N_COMB
W1_BLK = N_COMB + N_BLOCKS
WOUT_BLK = N_COMB + 2 * N_BLOCKS
W_SLAB_W = (WOUT_BLK + 1) * 128
# packed bias slab columns: [w_in, b_in, bz*, b0*, b1*, bout]
W_IN_COL = 0
B_IN_COL = 1
BZ_COL = 2
B0_COL = BZ_COL + N_COMB
B1_COL = B0_COL + N_BLOCKS
BOUT_COL = B1_COL + N_BLOCKS
B_SLAB_W = BOUT_COL + 1


# ------------------------------ the kernel ------------------------------
def _pixelnerf_kernel(proj_ref, xyzT_ref, featT_ref, wslab_ref, bslab_ref,
                      out_ref):
    # One grid step == one object: its NS views are projected, sampled, run
    # through the pre-combine MLP blocks, view-averaged and finished here.
    proj = proj_ref[0]                      # (3*NS, 5) f32: [scaled R | t | c]
    R = proj[:, 0:3]
    t = proj[:, 3:4]
    cadd = proj[:, 4:5]                     # cx*kx / cy*ky per row (0 on z rows)
    p = xyzT_ref[0]                         # (3, B) world-space points

    # world -> camera for all views at once (rows are coordinate-major:
    # [x_v0..x_vNS-1, y_..., z_...]); focal * latent-scale already folded into
    # the x/y rows by encode(), z rows are unscaled.
    xr = (R[:, 0:1] * p[0:1, :] + R[:, 1:2] * p[1:2, :]
          + R[:, 2:3] * p[2:3, :])                       # (3*NS, B)
    xc = xr + t

    sx = xc[0:NS]                                        # (-fx*kx) * x_cam
    sy = xc[NS:2 * NS]                                   # (-fy*ky) * y_cam
    xrz = xr[2 * NS:3 * NS]                              # rotation-only z
    xcz = xc[2 * NS:3 * NS]
    zf = -xrz                                            # z_feature (normalize_z)

    inv_z = 1.0 / (xcz + 1e-7)
    ix = jnp.clip(sx * inv_z + cadd[0:NS], 0.0, WL - 1.0)      # border padding
    iy = jnp.clip(sy * inv_z + cadd[NS:2 * NS], 0.0, HL - 1.0)
    x0 = jnp.floor(ix)
    y0 = jnp.floor(iy)
    wx = ix - x0
    wy = iy - y0
    x1 = jnp.minimum(x0 + 1.0, WL - 1.0)
    y1 = jnp.minimum(y0 + 1.0, HL - 1.0)

    # batched one-hot bilinear weights for all NS views: (NS, HW, B)
    hw_iota = lax.broadcasted_iota(jnp.int32, (NS, HW, B), 1)

    def corner(yc, xc_, w):
        idx = (yc * WL + xc_).astype(jnp.int32)[:, None, :]    # (NS, 1, B)
        return jnp.where(hw_iota == idx, w[:, None, :], 0.0)

    wmat = (corner(y0, x0, (1.0 - wy) * (1.0 - wx)) +
            corner(y0, x1, (1.0 - wy) * wx) +
            corner(y1, x0, wy * (1.0 - wx)) +
            corner(y1, x1, wy * wx)).astype(jnp.bfloat16)      # (NS, HW, B)

    # encoder.index(): bilinear sample on the MXU, (C_LAT,HW) @ (HW,B) per view
    feat = featT_ref[0]                                        # (NS,C_LAT,HW) bf16
    z_parts = [jnp.dot(feat[v], wmat[v], preferred_element_type=jnp.float32)
               for v in range(NS)]
    zT = jnp.concatenate(z_parts, axis=1)                      # (C_LAT, NS*B) f32
    zT_bf = zT.astype(jnp.bfloat16)
    zfT = jnp.concatenate([zf[v:v + 1, :] for v in range(NS)], axis=1)  # (1, NS*B)

    def wblk(i, width=D_HID):                  # bf16 weight block (D_HID, width)
        return wslab_ref[:, i * 128:i * 128 + width]

    def bias(i):                               # f32 bias column (D_HID, 1)
        return bslab_ref[:, i:i + 1]

    # ---------------------- ResnetFC (transposed) ----------------------
    # activations are (D_HID, M): channels in sublanes, points in lanes
    xT = bias(W_IN_COL) * zfT + bias(B_IN_COL)                 # lin_in (d_in=1)
    for blk in range(N_BLOCKS):
        if blk == COMBINE_LAYER:                               # combine_interleaved
            acc = xT[:, 0:B]
            for v in range(1, NS):
                acc = acc + xT[:, v * B:(v + 1) * B]
            xT = acc * (1.0 / NS)                              # (D_HID, B)
        if blk < COMBINE_LAYER:                                # lin_z[blk](z)
            xT = xT + jnp.dot(wblk(blk, C_LAT), zT_bf,
                              preferred_element_type=jnp.float32) + bias(BZ_COL + blk)
        # ResnetBlockFC (ReLU, identity shortcut since size_in == size_out)
        net = jnp.dot(wblk(W0_BLK + blk),
                      jnp.maximum(xT, 0.0).astype(jnp.bfloat16),
                      preferred_element_type=jnp.float32) + bias(B0_COL + blk)
        dxT = jnp.dot(wblk(W1_BLK + blk),
                      jnp.maximum(net, 0.0).astype(jnp.bfloat16),
                      preferred_element_type=jnp.float32) + bias(B1_COL + blk)
        xT = xT + dxT

    outF = jnp.dot(wblk(WOUT_BLK),
                   jnp.maximum(xT, 0.0).astype(jnp.bfloat16),
                   preferred_element_type=jnp.float32)         # (D_HID, B)
    outT = outF[0:D_OUT_PAD, :] + bslab_ref[0:D_OUT_PAD, BOUT_COL:BOUT_COL + 1]

    # rows 0..2 -> sigmoid(rgb); row 3 -> relu(sigma); rows 4..7 are padding
    row_o = lax.broadcasted_iota(jnp.int32, (D_OUT_PAD, B), 0)
    out_ref[0] = jnp.where(row_o < 3, jax.nn.sigmoid(outT),
                           jnp.maximum(outT, 0.0))


# ------------------------------- wrapper -------------------------------
def pixelnerf_forward(xyz, state, packed):
    """PixelNeRFNet.forward(xyz, coarse=True) for the default config."""
    xyzT = jnp.swapaxes(xyz, 1, 2)                           # (SB, 3, B)

    out_pad = pl.pallas_call(
        _pixelnerf_kernel,
        out_shape=jax.ShapeDtypeStruct((SB, D_OUT_PAD, B), jnp.float32),
        grid=(SB,),                                          # one object / step
        in_specs=[
            pl.BlockSpec((1, 3 * NS, 5), lambda s: (s, 0, 0)),       # proj
            pl.BlockSpec((1, 3, B), lambda s: (s, 0, 0)),            # xyzT
            pl.BlockSpec((1, NS, C_LAT, HW), lambda s: (s, 0, 0, 0)),  # featT
            pl.BlockSpec((D_HID, W_SLAB_W), lambda s: (0, 0)),       # wslab
            pl.BlockSpec((D_HID, B_SLAB_W), lambda s: (0, 0)),       # bslab
        ],
        out_specs=pl.BlockSpec((1, D_OUT_PAD, B), lambda s: (s, 0, 0)),
        compiler_params=pltpu.CompilerParams(
            dimension_semantics=("parallel",)),              # 2 TCs on v7x
    )(state['proj'], xyzT, state['featT'], packed['wslab'], packed['bslab'])

    # lane-dense (SB, 8, B) slab -> (SB, B, 4)
    return jnp.transpose(out_pad[:, :D_OUT, :], (0, 2, 1))


# -------------------- encode() glue (pose / intrinsics) ------------------
def encode(poses_c2w, focal, latent_nchw):
    """Mirror PixelNeRFNet.encode() pose/intrinsics bookkeeping (plain JAX).

    Builds the per-object projection slab consumed by the kernel: rows are
    coordinate-major [x rows per view, y rows, z rows]; focal * grid-sample
    index scale is folded into the x/y rows, the principal point (scaled) is
    carried as a 5th column, z rows stay unscaled (needed for 1/z and the
    -z_cam feature).
    """
    rot = jnp.swapaxes(poses_c2w[:, :3, :3], 1, 2)               # R^T
    trans = -jnp.einsum('nij,nj->ni', rot, poses_c2w[:, :3, 3])
    poses_w2c = jnp.concatenate([rot, trans[..., None]], axis=-1)  # (SB*NS,3,4)

    image_shape = jnp.array([IMG_W, IMG_H], jnp.float32)         # [W, H]
    focal2 = jnp.array([focal, -focal], jnp.float32)             # fy *= -1
    c = image_shape * 0.5
    latent_scaling = jnp.array([WL, HL], jnp.float32)
    latent_scaling = latent_scaling / (latent_scaling - 1.0) * 2.0
    scale = latent_scaling / image_shape
    # align_corners grid-sample index scale: ((u*scale - 1) + 1)*0.5*(L-1)
    k = scale * jnp.array([0.5 * (WL - 1.0), 0.5 * (HL - 1.0)], jnp.float32)

    one = jnp.ones((), jnp.float32)
    zero = jnp.zeros((), jnp.float32)
    row_scale = jnp.stack([-focal2[0] * k[0], -focal2[1] * k[1], one])
    c_col = jnp.stack([c[0] * k[0], c[1] * k[1], zero])

    P = poses_w2c.reshape(SB, NS, 3, 4)
    rows = P * row_scale[None, None, :, None]                    # (SB,NS,3,4)
    rows = jnp.concatenate(
        [rows, jnp.broadcast_to(c_col[None, None, :, None], (SB, NS, 3, 1))],
        axis=-1)                                                 # (SB,NS,3,5)
    proj = jnp.transpose(rows, (0, 2, 1, 3)).reshape(SB, 3 * NS, 5)

    # kernel layout: channels in sublanes, spatial flattened into lanes (bf16)
    featT = latent_nchw.reshape(SB, NS, C_LAT, HW).astype(jnp.bfloat16)
    # reference layout (NHWC-flattened, f32 view of the same bf16 values)
    feat_flat = jnp.transpose(latent_nchw, (0, 2, 3, 1)).reshape(
        SB, NS, HW, C_LAT).astype(jnp.float32)

    return dict(proj=proj, featT=featT, feat_flat=feat_flat,
                poses_w2c=poses_w2c, focal=focal2, c=c, scale=scale)


# --------------------------- parameter packing ---------------------------
def pack_params(params):
    """Pack all ResnetFC weights into one bf16 slab (128-lane-aligned blocks)
    and all biases / the d_in=1 lin_in weight into one small f32 slab.
    Done ONCE (not per forward call)."""
    def pad_wblock(w):                       # (rows<=64, cols<=128) -> (64,128)
        blk = jnp.zeros((D_HID, 128), jnp.float32)
        return blk.at[:w.shape[0], :w.shape[1]].set(w)

    blocks = ([pad_wblock(params['wz'][b].T) for b in range(N_COMB)]
              + [pad_wblock(params['w0'][b].T) for b in range(N_BLOCKS)]
              + [pad_wblock(params['w1'][b].T) for b in range(N_BLOCKS)]
              + [pad_wblock(params['wout'].T)])
    wslab = jnp.concatenate(blocks, axis=1).astype(jnp.bfloat16)  # (64, 1152)

    def bcol(v):                             # (1, n<=64) -> (64, 1)
        col = jnp.zeros((D_HID, 1), jnp.float32)
        return col.at[:v.shape[1], :].set(v.T)

    bias_cols = ([bcol(params['w_in']), bcol(params['b_in'])]
                 + [bcol(params['bz'][b]) for b in range(N_COMB)]
                 + [bcol(params['b0'][b]) for b in range(N_BLOCKS)]
                 + [bcol(params['b1'][b]) for b in range(N_BLOCKS)]
                 + [bcol(params['bout'])])
    bslab = jnp.concatenate(bias_cols, axis=1)                    # (64, 11) f32
    return dict(wslab=wslab, bslab=bslab)


# --------------------------- parameter init -----------------------------
def init_params(key):
    ks = jax.random.split(key, 9)

    def lin(k, fan_in, shape, scl=1.0):
        return (jax.random.normal(k, shape, jnp.float32)
                * (scl / jnp.sqrt(float(fan_in))))

    return dict(
        w_in=lin(ks[0], D_IN, (D_IN, D_HID)),
        b_in=jnp.full((1, D_HID), 0.01, jnp.float32),
        wz=lin(ks[1], C_LAT, (N_COMB, C_LAT, D_HID)),
        bz=jax.random.normal(ks[2], (N_COMB, 1, D_HID), jnp.float32) * 0.01,
        w0=lin(ks[3], D_HID, (N_BLOCKS, D_HID, D_HID)),
        b0=jax.random.normal(ks[4], (N_BLOCKS, 1, D_HID), jnp.float32) * 0.01,
        w1=lin(ks[5], D_HID, (N_BLOCKS, D_HID, D_HID), scl=0.5),
        b1=jax.random.normal(ks[6], (N_BLOCKS, 1, D_HID), jnp.float32) * 0.01,
        wout=lin(ks[7], D_HID, (D_HID, D_OUT)),
        bout=jnp.zeros((1, D_OUT), jnp.float32),
    )


# ------------------------ plain-JAX reference ----------------------------
def reference_forward(xyz, state, params):
    hp = jax.lax.Precision.HIGHEST
    poses = state['poses_w2c']
    xyz_rep = jnp.repeat(xyz, NS, axis=0)                        # (SB*NS, B, 3)
    xyz_rot = jnp.einsum('nij,nbj->nbi', poses[:, :, :3], xyz_rep, precision=hp)
    xyz_cam = xyz_rot + poses[:, None, :, 3]
    z_feature = (-xyz_rot[..., 2]).reshape(-1, 1)

    uv = -xyz_cam[..., :2] / (xyz_cam[..., 2:3] + 1e-7)
    uv = uv * state['focal'] + state['c']
    uvn = uv * state['scale'] - 1.0
    ix = jnp.clip((uvn[..., 0] + 1.0) * 0.5 * (WL - 1), 0.0, WL - 1.0)
    iy = jnp.clip((uvn[..., 1] + 1.0) * 0.5 * (HL - 1), 0.0, HL - 1.0)
    x0, y0 = jnp.floor(ix), jnp.floor(iy)
    wx, wy = ix - x0, iy - y0
    x1 = jnp.minimum(x0 + 1.0, WL - 1.0)
    y1 = jnp.minimum(y0 + 1.0, HL - 1.0)

    feat = state['feat_flat'].reshape(SB * NS, HW, C_LAT)
    bidx = jnp.arange(SB * NS)[:, None]

    def samp(yc, xc):
        idx = (yc * WL + xc).astype(jnp.int32)
        return feat[bidx, idx]                                   # (N, B, C)

    latent = (samp(y0, x0) * ((1 - wy) * (1 - wx))[..., None]
              + samp(y0, x1) * ((1 - wy) * wx)[..., None]
              + samp(y1, x0) * (wy * (1 - wx))[..., None]
              + samp(y1, x1) * (wy * wx)[..., None])
    z = latent.reshape(-1, C_LAT)

    x = z_feature * params['w_in'] + params['b_in']
    for blk in range(N_BLOCKS):
        if blk == COMBINE_LAYER:
            x = x.reshape(SB, NS, B, D_HID).mean(axis=1).reshape(SB * B, D_HID)
        if blk < COMBINE_LAYER:
            x = x + jnp.dot(z, params['wz'][blk], precision=hp) + params['bz'][blk]
        net = jnp.dot(jnp.maximum(x, 0.0), params['w0'][blk], precision=hp) + params['b0'][blk]
        dx = jnp.dot(jnp.maximum(net, 0.0), params['w1'][blk], precision=hp) + params['b1'][blk]
        x = x + dx
    out = jnp.dot(jnp.maximum(x, 0.0), params['wout'], precision=hp) + params['bout']
    out = out.reshape(SB, B, D_OUT)
    return jnp.concatenate([jax.nn.sigmoid(out[..., :3]),
                            jnp.maximum(out[..., 3:], 0.0)], axis=-1)


# --------------------------------- main ----------------------------------
if __name__ == "__main__":
    key = jax.random.PRNGKey(0)
    k_xyz, k_feat, k_rot, k_trans, k_par = jax.random.split(key, 5)

    xyz = jax.random.normal(k_xyz, (SB, B, 3), jnp.float32) * 0.5
    Rmats, _ = jnp.linalg.qr(jax.random.normal(k_rot, (SB * NS, 3, 3), jnp.float32))
    t = jax.random.normal(k_trans, (SB * NS, 3), jnp.float32) + jnp.array([0.0, 0.0, 4.0])
    bottom = jnp.tile(jnp.array([[[0.0, 0.0, 0.0, 1.0]]], jnp.float32), (SB * NS, 1, 1))
    poses_c2w = jnp.concatenate(
        [jnp.concatenate([Rmats, t[..., None]], axis=-1), bottom], axis=1)

    # synthetic encoder latent (stands in for the ResNet-34 backbone output)
    latent_nchw = jax.random.normal(k_feat, (SB * NS, C_LAT, HL, WL), jnp.float32)
    focal = 20.0

    params = init_params(k_par)

    # The kernel uses bf16 MXU operands (per perf review); round the model
    # weights and the encoder latent to bf16-representable values ONCE so the
    # packed bf16 slabs are lossless and the f32 reference consumes the exact
    # same numbers.  Remaining kernel-vs-reference differences come only from
    # casting in-kernel activations / bilinear weights to bf16.
    def _round_bf16(a):
        return a.astype(jnp.bfloat16).astype(jnp.float32)

    params = jax.tree_util.tree_map(_round_bf16, params)
    latent_nchw = _round_bf16(latent_nchw)

    state = encode(poses_c2w, focal, latent_nchw)
    packed = pack_params(params)          # one-time weight packing (2 slabs)

    forward = jax.jit(pixelnerf_forward)
    out = forward(xyz, state, packed)
    out = jax.block_until_ready(out)

    assert out.shape == (SB, B, D_OUT)
    assert bool(jnp.all(jnp.isfinite(out)))

    ref = reference_forward(xyz, state, params)
    max_err = float(jnp.max(jnp.abs(out - ref)))
    # tolerance covers bf16 MXU operands in the kernel vs the f32 reference
    assert max_err < 5e-2, f"kernel/reference mismatch: max abs err = {max_err}"

    print("KERNEL_OK")
</pallas_src>

<mosaic_0001>
module attributes {stable_mosaic.version = 11 : i64} {
  func.func @_pixelnerf_kernel(%arg0: i32, %arg1: memref<1x6x5xf32, #tpu.memory_space<vmem>>, %arg2: memref<1x3x128xf32, #tpu.memory_space<vmem>>, %arg3: memref<1x2x32x64xbf16, #tpu.memory_space<vmem>>, %arg4: memref<64x1152xbf16, #tpu.memory_space<vmem>>, %arg5: memref<64x11xf32, #tpu.memory_space<vmem>>, %arg6: memref<1x8x128xf32, #tpu.memory_space<vmem>>) attributes {dimension_semantics = [#tpu.dimension_semantics<parallel>], iteration_bounds = array<i64: 2>, scalar_prefetch = 0 : i64, scratch_operands = 0 : i64, tpu.core_type = #tpu.core_type<tc>, window_params = [{transform_indices = @transform_0, window_bounds = array<i64: 1, 6, 5>}, {transform_indices = @transform_1, window_bounds = array<i64: 1, 3, 128>}, {transform_indices = @transform_2, window_bounds = array<i64: 1, 2, 32, 64>}, {pipeline_mode = #tpu.pipeline_mode<synchronous>, transform_indices = @transform_3, window_bounds = array<i64: 64, 1152>}, {pipeline_mode = #tpu.pipeline_mode<synchronous>, transform_indices = @transform_4, window_bounds = array<i64: 64, 11>}, {transform_indices = @transform_5, window_bounds = array<i64: 1, 8, 128>}]} {
    %c0 = arith.constant 0 : index
    %c0_0 = arith.constant 0 : index
    %c0_1 = arith.constant 0 : index
    %0 = vector.load %arg1[%c0, %c0_0, %c0_1] : memref<1x6x5xf32, #tpu.memory_space<vmem>>, vector<1x6x5xf32>
    %1 = vector.shape_cast %0 : vector<1x6x5xf32> to vector<6x5xf32>
    %2 = vector.extract_strided_slice %1 {offsets = [0, 0], sizes = [6, 3], strides = [1, 1]} : vector<6x5xf32> to vector<6x3xf32>
    %3 = vector.extract_strided_slice %1 {offsets = [0, 3], sizes = [6, 1], strides = [1, 1]} : vector<6x5xf32> to vector<6x1xf32>
    %4 = vector.extract_strided_slice %1 {offsets = [0, 4], sizes = [6, 1], strides = [1, 1]} : vector<6x5xf32> to vector<6x1xf32>
    %c0_2 = arith.constant 0 : index
    %c0_3 = arith.constant 0 : index
    %c0_4 = arith.constant 0 : index
    %5 = vector.load %arg2[%c0_2, %c0_3, %c0_4] : memref<1x3x128xf32, #tpu.memory_space<vmem>>, vector<1x3x128xf32>
    %6 = vector.shape_cast %5 : vector<1x3x128xf32> to vector<3x128xf32>
    %7 = vector.extract_strided_slice %2 {offsets = [0, 0], sizes = [6, 1], strides = [1, 1]} : vector<6x3xf32> to vector<6x1xf32>
    %8 = vector.extract_strided_slice %6 {offsets = [0, 0], sizes = [1, 128], strides = [1, 1]} : vector<3x128xf32> to vector<1x128xf32>
    %9 = vector.broadcast %7 : vector<6x1xf32> to vector<6x128xf32>
    %10 = vector.broadcast %8 : vector<1x128xf32> to vector<6x128xf32>
    %11 = arith.mulf %9, %10 : vector<6x128xf32>
    %12 = vector.extract_strided_slice %2 {offsets = [0, 1], sizes = [6, 1], strides = [1, 1]} : vector<6x3xf32> to vector<6x1xf32>
    %13 = vector.extract_strided_slice %6 {offsets = [1, 0], sizes = [1, 128], strides = [1, 1]} : vector<3x128xf32> to vector<1x128xf32>
    %14 = vector.broadcast %12 : vector<6x1xf32> to vector<6x128xf32>
    %15 = vector.broadcast %13 : vector<1x128xf32> to vector<6x128xf32>
    %16 = arith.mulf %14, %15 : vector<6x128xf32>
    %17 = arith.addf %11, %16 : vector<6x128xf32>
    %18 = vector.extract_strided_slice %2 {offsets = [0, 2], sizes = [6, 1], strides = [1, 1]} : vector<6x3xf32> to vector<6x1xf32>
    %19 = vector.extract_strided_slice %6 {offsets = [2, 0], sizes = [1, 128], strides = [1, 1]} : vector<3x128xf32> to vector<1x128xf32>
    %20 = vector.broadcast %18 : vector<6x1xf32> to vector<6x128xf32>
    %21 = vector.broadcast %19 : vector<1x128xf32> to vector<6x128xf32>
    %22 = arith.mulf %20, %21 : vector<6x128xf32>
    %23 = arith.addf %17, %22 : vector<6x128xf32>
    %24 = vector.broadcast %3 : vector<6x1xf32> to vector<6x128xf32>
    %25 = arith.addf %23, %24 : vector<6x128xf32>
    %26 = vector.extract_strided_slice %25 {offsets = [0, 0], sizes = [2, 128], strides = [1, 1]} : vector<6x128xf32> to vector<2x128xf32>
    %27 = vector.extract_strided_slice %25 {offsets = [2, 0], sizes = [2, 128], strides = [1, 1]} : vector<6x128xf32> to vector<2x128xf32>
    %28 = vector.extract_strided_slice %23 {offsets = [4, 0], sizes = [2, 128], strides = [1, 1]} : vector<6x128xf32> to vector<2x128xf32>
    %29 = vector.extract_strided_slice %25 {offsets = [4, 0], sizes = [2, 128], strides = [1, 1]} : vector<6x128xf32> to vector<2x128xf32>
    %cst = arith.constant 0.000000e+00 : f32
    %30 = vector.broadcast %cst : f32 to vector<2x128xf32>
    %31 = arith.subf %30, %28 : vector<2x128xf32>
    %cst_5 = arith.constant 1.000000e-07 : f32
    %32 = vector.broadcast %cst_5 : f32 to vector<2x128xf32>
    %33 = arith.addf %29, %32 : vector<2x128xf32>
    %cst_6 = arith.constant 1.000000e+00 : f32
    %34 = vector.broadcast %cst_6 : f32 to vector<2x128xf32>
    %35 = arith.divf %34, %33 : vector<2x128xf32>
    %36 = arith.mulf %26, %35 : vector<2x128xf32>
    %37 = vector.extract_strided_slice %4 {offsets = [0, 0], sizes = [2, 1], strides = [1, 1]} : vector<6x1xf32> to vector<2x1xf32>
    %38 = vector.broadcast %37 : vector<2x1xf32> to vector<2x128xf32>
    %39 = arith.addf %36, %38 : vector<2x128xf32>
    %cst_7 = arith.constant 0.000000e+00 : f32
    %cst_8 = arith.constant 7.000000e+00 : f32
    %40 = vector.broadcast %cst_7 : f32 to vector<2x128xf32>
    %41 = arith.maximumf %40, %39 : vector<2x128xf32>
    %42 = vector.broadcast %cst_8 : f32 to vector<2x128xf32>
    %43 = arith.minimumf %42, %41 : vector<2x128xf32>
    %44 = arith.mulf %27, %35 : vector<2x128xf32>
    %45 = vector.extract_strided_slice %4 {offsets = [2, 0], sizes = [2, 1], strides = [1, 1]} : vector<6x1xf32> to vector<2x1xf32>
    %46 = vector.broadcast %45 : vector<2x1xf32> to vector<2x128xf32>
    %47 = arith.addf %44, %46 : vector<2x128xf32>
    %cst_9 = arith.constant 0.000000e+00 : f32
    %cst_10 = arith.constant 7.000000e+00 : f32
    %48 = vector.broadcast %cst_9 : f32 to vector<2x128xf32>
    %49 = arith.maximumf %48, %47 : vector<2x128xf32>
    %50 = vector.broadcast %cst_10 : f32 to vector<2x128xf32>
    %51 = arith.minimumf %50, %49 : vector<2x128xf32>
    %52 = math.floor %43 : vector<2x128xf32>
    %53 = math.floor %51 : vector<2x128xf32>
    %54 = arith.subf %43, %52 : vector<2x128xf32>
    %55 = arith.subf %51, %53 : vector<2x128xf32>
    %cst_11 = arith.constant 1.000000e+00 : f32
    %56 = vector.broadcast %cst_11 : f32 to vector<2x128xf32>
    %57 = arith.addf %52, %56 : vector<2x128xf32>
    %cst_12 = arith.constant 7.000000e+00 : f32
    %58 = vector.broadcast %cst_12 : f32 to vector<2x128xf32>
    %59 = arith.minimumf %57, %58 : vector<2x128xf32>
    %cst_13 = arith.constant 1.000000e+00 : f32
    %60 = vector.broadcast %cst_13 : f32 to vector<2x128xf32>
    %61 = arith.addf %53, %60 : vector<2x128xf32>
    %cst_14 = arith.constant 7.000000e+00 : f32
    %62 = vector.broadcast %cst_14 : f32 to vector<2x128xf32>
    %63 = arith.minimumf %61, %62 : vector<2x128xf32>
    %64 = tpu.iota {dimensions = array<i32: 1>} : vector<2x64x128xi32>
    %cst_15 = arith.constant 1.000000e+00 : f32
    %65 = vector.broadcast %cst_15 : f32 to vector<2x128xf32>
    %66 = arith.subf %65, %55 : vector<2x128xf32>
    %cst_16 = arith.constant 1.000000e+00 : f32
    %67 = vector.broadcast %cst_16 : f32 to vector<2x128xf32>
    %68 = arith.subf %67, %54 : vector<2x128xf32>
    %69 = arith.mulf %66, %68 : vector<2x128xf32>
    %cst_17 = arith.constant 8.000000e+00 : f32
    %70 = vector.broadcast %cst_17 : f32 to vector<2x128xf32>
    %71 = arith.mulf %53, %70 : vector<2x128xf32>
    %72 = arith.addf %71, %52 : vector<2x128xf32>
    %73 = arith.fptosi %72 : vector<2x128xf32> to vector<2x128xi32>
    %74 = vector.shape_cast %73 : vector<2x128xi32> to vector<2x1x128xi32>
    %75 = vector.broadcast %74 : vector<2x1x128xi32> to vector<2x64x128xi32>
    %76 = arith.cmpi eq, %64, %75 : vector<2x64x128xi32>
    %77 = vector.shape_cast %69 : vector<2x128xf32> to vector<2x1x128xf32>
    %cst_18 = arith.constant 0.000000e+00 : f32
    %78 = vector.shape_cast %77 : vector<2x1x128xf32> to vector<2x1x128xf32>
    %79 = vector.broadcast %78 : vector<2x1x128xf32> to vector<2x64x128xf32>
    %80 = vector.broadcast %cst_18 : f32 to vector<2x64x128xf32>
    %81 = arith.select %76, %79, %80 : vector<2x64x128xi1>, vector<2x64x128xf32>
    %cst_19 = arith.constant 1.000000e+00 : f32
    %82 = vector.broadcast %cst_19 : f32 to vector<2x128xf32>
    %83 = arith.subf %82, %55 : vector<2x128xf32>
    %84 = arith.mulf %83, %54 : vector<2x128xf32>
    %cst_20 = arith.constant 8.000000e+00 : f32
    %85 = vector.broadcast %cst_20 : f32 to vector<2x128xf32>
    %86 = arith.mulf %53, %85 : vector<2x128xf32>
    %87 = arith.addf %86, %59 : vector<2x128xf32>
    %88 = arith.fptosi %87 : vector<2x128xf32> to vector<2x128xi32>
    %89 = vector.shape_cast %88 : vector<2x128xi32> to vector<2x1x128xi32>
    %90 = vector.broadcast %89 : vector<2x1x128xi32> to vector<2x64x128xi32>
    %91 = arith.cmpi eq, %64, %90 : vector<2x64x128xi32>
    %92 = vector.shape_cast %84 : vector<2x128xf32> to vector<2x1x128xf32>
    %cst_21 = arith.constant 0.000000e+00 : f32
    %93 = vector.shape_cast %92 : vector<2x1x128xf32> to vector<2x1x128xf32>
    %94 = vector.broadcast %93 : vector<2x1x128xf32> to vector<2x64x128xf32>
    %95 = vector.broadcast %cst_21 : f32 to vector<2x64x128xf32>
    %96 = arith.select %91, %94, %95 : vector<2x64x128xi1>, vector<2x64x128xf32>
    %97 = arith.addf %81, %96 : vector<2x64x128xf32>
    %cst_22 = arith.constant 1.000000e+00 : f32
    %98 = vector.broadcast %cst_22 : f32 to vector<2x128xf32>
    %99 = arith.subf %98, %54 : vector<2x128xf32>
    %100 = arith.mulf %55, %99 : vector<2x128xf32>
    %cst_23 = arith.constant 8.000000e+00 : f32
    %101 = vector.broadcast %cst_23 : f32 to vector<2x128xf32>
    %102 = arith.mulf %63, %101 : vector<2x128xf32>
    %103 = arith.addf %102, %52 : vector<2x128xf32>
    %104 = arith.fptosi %103 : vector<2x128xf32> to vector<2x128xi32>
    %105 = vector.shape_cast %104 : vector<2x128xi32> to vector<2x1x128xi32>
    %106 = vector.broadcast %105 : vector<2x1x128xi32> to vector<2x64x128xi32>
    %107 = arith.cmpi eq, %64, %106 : vector<2x64x128xi32>
    %108 = vector.shape_cast %100 : vector<2x128xf32> to vector<2x1x128xf32>
    %cst_24 = arith.constant 0.000000e+00 : f32
    %109 = vector.shape_cast %108 : vector<2x1x128xf32> to vector<2x1x128xf32>
    %110 = vector.broadcast %109 : vector<2x1x128xf32> to vector<2x64x128xf32>
    %111 = vector.broadcast %cst_24 : f32 to vector<2x64x128xf32>
    %112 = arith.select %107, %110, %111 : vector<2x64x128xi1>, vector<2x64x128xf32>
    %113 = arith.addf %97, %112 : vector<2x64x128xf32>
    %114 = arith.mulf %55, %54 : vector<2x128xf32>
    %cst_25 = arith.constant 8.000000e+00 : f32
    %115 = vector.broadcast %cst_25 : f32 to vector<2x128xf32>
    %116 = arith.mulf %63, %115 : vector<2x128xf32>
    %117 = arith.addf %116, %59 : vector<2x128xf32>
    %118 = arith.fptosi %117 : vector<2x128xf32> to vector<2x128xi32>
    %119 = vector.shape_cast %118 : vector<2x128xi32> to vector<2x1x128xi32>
    %120 = vector.broadcast %119 : vector<2x1x128xi32> to vector<2x64x128xi32>
    %121 = arith.cmpi eq, %64, %120 : vector<2x64x128xi32>
    %122 = vector.shape_cast %114 : vector<2x128xf32> to vector<2x1x128xf32>
    %cst_26 = arith.constant 0.000000e+00 : f32
    %123 = vector.shape_cast %122 : vector<2x1x128xf32> to vector<2x1x128xf32>
    %124 = vector.broadcast %123 : vector<2x1x128xf32> to vector<2x64x128xf32>
    %125 = vector.broadcast %cst_26 : f32 to vector<2x64x128xf32>
    %126 = arith.select %121, %124, %125 : vector<2x64x128xi1>, vector<2x64x128xf32>
    %127 = arith.addf %113, %126 : vector<2x64x128xf32>
    %128 = arith.truncf %127 : vector<2x64x128xf32> to vector<2x64x128xbf16>
    %c0_27 = arith.constant 0 : index
    %c0_28 = arith.constant 0 : index
    %c0_29 = arith.constant 0 : index
    %c0_30 = arith.constant 0 : index
    %129 = vector.load %arg3[%c0_27, %c0_28, %c0_29, %c0_30] : memref<1x2x32x64xbf16, #tpu.memory_space<vmem>>, vector<1x2x32x64xbf16>
    %130 = vector.shape_cast %129 : vector<1x2x32x64xbf16> to vector<2x32x64xbf16>
    %131 = vector.extract_strided_slice %130 {offsets = [0, 0, 0], sizes = [1, 32, 64], strides = [1, 1, 1]} : vector<2x32x64xbf16> to vector<1x32x64xbf16>
    %132 = vector.shape_cast %131 : vector<1x32x64xbf16> to vector<32x64xbf16>
    %133 = vector.extract_strided_slice %128 {offsets = [0, 0, 0], sizes = [1, 64, 128], strides = [1, 1, 1]} : vector<2x64x128xbf16> to vector<1x64x128xbf16>
    %134 = vector.shape_cast %133 : vector<1x64x128xbf16> to vector<64x128xbf16>
    %cst_31 = arith.constant dense<0.000000e+00> : vector<32x128xf32>
    %135 = tpu.matmul %132, %134, %cst_31 {dimension_numbers = #tpu.dot_dimension_numbers<[1], [0], [0], [1], [0, 0, 1, 1], [], []>} : vector<32x64xbf16>, vector<64x128xbf16>, vector<32x128xf32> -> vector<32x128xf32>
    %136 = vector.extract_strided_slice %130 {offsets = [1, 0, 0], sizes = [1, 32, 64], strides = [1, 1, 1]} : vector<2x32x64xbf16> to vector<1x32x64xbf16>
    %137 = vector.shape_cast %136 : vector<1x32x64xbf16> to vector<32x64xbf16>
    %138 = vector.extract_strided_slice %128 {offsets = [1, 0, 0], sizes = [1, 64, 128], strides = [1, 1, 1]} : vector<2x64x128xbf16> to vector<1x64x128xbf16>
    %139 = vector.shape_cast %138 : vector<1x64x128xbf16> to vector<64x128xbf16>
    %cst_32 = arith.constant dense<0.000000e+00> : vector<32x128xf32>
    %140 = tpu.matmul %137, %139, %cst_32 {dimension_numbers = #tpu.dot_dimension_numbers<[1], [0], [0], [1], [0, 0, 1, 1], [], []>} : vector<32x64xbf16>, vector<64x128xbf16>, vector<32x128xf32> -> vector<32x128xf32>
    %141 = tpu.concatenate %135, %140 in 1 : vector<32x128xf32>, vector<32x128xf32> -> vector<32x256xf32>
    %142 = arith.truncf %141 : vector<32x256xf32> to vector<32x256xbf16>
    %143 = vector.extract_strided_slice %31 {offsets = [0, 0], sizes = [1, 128], strides = [1, 1]} : vector<2x128xf32> to vector<1x128xf32>
    %144 = vector.extract_strided_slice %31 {offsets = [1, 0], sizes = [1, 128], strides = [1, 1]} : vector<2x128xf32> to vector<1x128xf32>
    %145 = tpu.concatenate %143, %144 in 1 : vector<1x128xf32>, vector<1x128xf32> -> vector<1x256xf32>
    %c0_33 = arith.constant 0 : index
    %c0_34 = arith.constant 0 : index
    %146 = vector.load %arg5[%c0_33, %c0_34] : memref<64x11xf32, #tpu.memory_space<vmem>>, vector<64x1xf32>
    %147 = vector.broadcast %146 : vector<64x1xf32> to vector<64x256xf32>
    %148 = vector.broadcast %145 : vector<1x256xf32> to vector<64x256xf32>
    %149 = arith.mulf %147, %148 : vector<64x256xf32>
    %c0_35 = arith.constant 0 : index
    %c1 = arith.constant 1 : index
    %150 = vector.load %arg5[%c0_35, %c1] : memref<64x11xf32, #tpu.memory_space<vmem>>, vector<64x1xf32>
    %151 = vector.broadcast %150 : vector<64x1xf32> to vector<64x256xf32>
    %152 = arith.addf %149, %151 : vector<64x256xf32>
    %c0_36 = arith.constant 0 : index
    %c0_37 = arith.constant 0 : index
    %153 = vector.load %arg4[%c0_36, %c0_37] : memref<64x1152xbf16, #tpu.memory_space<vmem>>, vector<64x32xbf16>
    %cst_38 = arith.constant dense<0.000000e+00> : vector<64x256xf32>
    %154 = tpu.matmul %153, %142, %cst_38 {dimension_numbers = #tpu.dot_dimension_numbers<[1], [0], [0], [1], [0, 0, 1, 1], [], []>} : vector<64x32xbf16>, vector<32x256xbf16>, vector<64x256xf32> -> vector<64x256xf32>
    %155 = arith.addf %152, %154 : vector<64x256xf32>
    %c0_39 = arith.constant 0 : index
    %c2 = arith.constant 2 : index
    %156 = vector.load %arg5[%c0_39, %c2] : memref<64x11xf32, #tpu.memory_space<vmem>>, vector<64x1xf32>
    %157 = vector.broadcast %156 : vector<64x1xf32> to vector<64x256xf32>
    %158 = arith.addf %155, %157 : vector<64x256xf32>
    %c0_40 = arith.constant 0 : index
    %c256 = arith.constant 256 : index
    %159 = vector.load %arg4[%c0_40, %c256] : memref<64x1152xbf16, #tpu.memory_space<vmem>>, vector<64x64xbf16>
    %cst_41 = arith.constant 0.000000e+00 : f32
    %160 = vector.broadcast %cst_41 : f32 to vector<64x256xf32>
    %161 = arith.maximumf %158, %160 : vector<64x256xf32>
    %162 = arith.truncf %161 : vector<64x256xf32> to vector<64x256xbf16>
    %cst_42 = arith.constant dense<0.000000e+00> : vector<64x256xf32>
    %163 = tpu.matmul %159, %162, %cst_42 {dimension_numbers = #tpu.dot_dimension_numbers<[1], [0], [0], [1], [0, 0, 1, 1], [], []>} : vector<64x64xbf16>, vector<64x256xbf16>, vector<64x256xf32> -> vector<64x256xf32>
    %c0_43 = arith.constant 0 : index
    %c4 = arith.constant 4 : index
    %164 = vector.load %arg5[%c0_43, %c4] : memref<64x11xf32, #tpu.memory_space<vmem>>, vector<64x1xf32>
    %165 = vector.broadcast %164 : vector<64x1xf32> to vector<64x256xf32>
    %166 = arith.addf %163, %165 : vector<64x256xf32>
    %c0_44 = arith.constant 0 : index
    %c640 = arith.constant 640 : index
    %167 = vector.load %arg4[%c0_44, %c640] : memref<64x1152xbf16, #tpu.memory_space<vmem>>, vector<64x64xbf16>
    %cst_45 = arith.constant 0.000000e+00 : f32
    %168 = vector.broadcast %cst_45 : f32 to vector<64x256xf32>
    %169 = arith.maximumf %166, %168 : vector<64x256xf32>
    %170 = arith.truncf %169 : vector<64x256xf32> to vector<64x256xbf16>
    %cst_46 = arith.constant dense<0.000000e+00> : vector<64x256xf32>
    %171 = tpu.matmul %167, %170, %cst_46 {dimension_numbers = #tpu.dot_dimension_numbers<[1], [0], [0], [1], [0, 0, 1, 1], [], []>} : vector<64x64xbf16>, vector<64x256xbf16>, vector<64x256xf32> -> vector<64x256xf32>
    %c0_47 = arith.constant 0 : index
    %c7 = arith.constant 7 : index
    %172 = vector.load %arg5[%c0_47, %c7] : memref<64x11xf32, #tpu.memory_space<vmem>>, vector<64x1xf32>
    %173 = vector.broadcast %172 : vector<64x1xf32> to vector<64x256xf32>
    %174 = arith.addf %171, %173 : vector<64x256xf32>
    %175 = arith.addf %158, %174 : vector<64x256xf32>
    %c0_48 = arith.constant 0 : index
    %c128 = arith.constant 128 : index
    %176 = vector.load %arg4[%c0_48, %c128] : memref<64x1152xbf16, #tpu.memory_space<vmem>>, vector<64x32xbf16>
    %cst_49 = arith.constant dense<0.000000e+00> : vector<64x256xf32>
    %177 = tpu.matmul %176, %142, %cst_49 {dimension_numbers = #tpu.dot_dimension_numbers<[1], [0], [0], [1], [0, 0, 1, 1], [], []>} : vector<64x32xbf16>, vector<32x256xbf16>, vector<64x256xf32> -> vector<64x256xf32>
    %178 = arith.addf %175, %177 : vector<64x256xf32>
    %c0_50 = arith.constant 0 : index
    %c3 = arith.constant 3 : index
    %179 = vector.load %arg5[%c0_50, %c3] : memref<64x11xf32, #tpu.memory_space<vmem>>, vector<64x1xf32>
    %180 = vector.broadcast %179 : vector<64x1xf32> to vector<64x256xf32>
    %181 = arith.addf %178, %180 : vector<64x256xf32>
    %c0_51 = arith.constant 0 : index
    %c384 = arith.constant 384 : index
    %182 = vector.load %arg4[%c0_51, %c384] : memref<64x1152xbf16, #tpu.memory_space<vmem>>, vector<64x64xbf16>
    %cst_52 = arith.constant 0.000000e+00 : f32
    %183 = vector.broadcast %cst_52 : f32 to vector<64x256xf32>
    %184 = arith.maximumf %181, %183 : vector<64x256xf32>
    %185 = arith.truncf %184 : vector<64x256xf32> to vector<64x256xbf16>
    %cst_53 = arith.constant dense<0.000000e+00> : vector<64x256xf32>
    %186 = tpu.matmul %182, %185, %cst_53 {dimension_numbers = #tpu.dot_dimension_numbers<[1], [0], [0], [1], [0, 0, 1, 1], [], []>} : vector<64x64xbf16>, vector<64x256xbf16>, vector<64x256xf32> -> vector<64x256xf32>
    %c0_54 = arith.constant 0 : index
    %c5 = arith.constant 5 : index
    %187 = vector.load %arg5[%c0_54, %c5] : memref<64x11xf32, #tpu.memory_space<vmem>>, vector<64x1xf32>
    %188 = vector.broadcast %187 : vector<64x1xf32> to vector<64x256xf32>
    %189 = arith.addf %186, %188 : vector<64x256xf32>
    %c0_55 = arith.constant 0 : index
    %c768 = arith.constant 768 : index
    %190 = vector.load %arg4[%c0_55, %c768] : memref<64x1152xbf16, #tpu.memory_space<vmem>>, vector<64x64xbf16>
    %cst_56 = arith.constant 0.000000e+00 : f32
    %191 = vector.broadcast %cst_56 : f32 to vector<64x256xf32>
    %192 = arith.maximumf %189, %191 : vector<64x256xf32>
    %193 = arith.truncf %192 : vector<64x256xf32> to vector<64x256xbf16>
    %cst_57 = arith.constant dense<0.000000e+00> : vector<64x256xf32>
    %194 = tpu.matmul %190, %193, %cst_57 {dimension_numbers = #tpu.dot_dimension_numbers<[1], [0], [0], [1], [0, 0, 1, 1], [], []>} : vector<64x64xbf16>, vector<64x256xbf16>, vector<64x256xf32> -> vector<64x256xf32>
    %c0_58 = arith.constant 0 : index
    %c8 = arith.constant 8 : index
    %195 = vector.load %arg5[%c0_58, %c8] : memref<64x11xf32, #tpu.memory_space<vmem>>, vector<64x1xf32>
    %196 = vector.broadcast %195 : vector<64x1xf32> to vector<64x256xf32>
    %197 = arith.addf %194, %196 : vector<64x256xf32>
    %198 = arith.addf %181, %197 : vector<64x256xf32>
    %199 = vector.extract_strided_slice %198 {offsets = [0, 0], sizes = [64, 128], strides = [1, 1]} : vector<64x256xf32> to vector<64x128xf32>
    %200 = vector.extract_strided_slice %198 {offsets = [0, 128], sizes = [64, 128], strides = [1, 1]} : vector<64x256xf32> to vector<64x128xf32>
    %201 = arith.addf %199, %200 : vector<64x128xf32>
    %cst_59 = arith.constant 5.000000e-01 : f32
    %202 = vector.broadcast %cst_59 : f32 to vector<64x128xf32>
    %203 = arith.mulf %201, %202 : vector<64x128xf32>
    %c0_60 = arith.constant 0 : index
    %c512 = arith.constant 512 : index
    %204 = vector.load %arg4[%c0_60, %c512] : memref<64x1152xbf16, #tpu.memory_space<vmem>>, vector<64x64xbf16>
    %cst_61 = arith.constant 0.000000e+00 : f32
    %205 = vector.broadcast %cst_61 : f32 to vector<64x128xf32>
    %206 = arith.maximumf %203, %205 : vector<64x128xf32>
    %207 = arith.truncf %206 : vector<64x128xf32> to vector<64x128xbf16>
    %cst_62 = arith.constant dense<0.000000e+00> : vector<64x128xf32>
    %208 = tpu.matmul %204, %207, %cst_62 {dimension_numbers = #tpu.dot_dimension_numbers<[1], [0], [0], [1], [0, 0, 1, 1], [], []>} : vector<64x64xbf16>, vector<64x128xbf16>, vector<64x128xf32> -> vector<64x128xf32>
    %c0_63 = arith.constant 0 : index
    %c6 = arith.constant 6 : index
    %209 = vector.load %arg5[%c0_63, %c6] : memref<64x11xf32, #tpu.memory_space<vmem>>, vector<64x1xf32>
    %210 = vector.broadcast %209 : vector<64x1xf32> to vector<64x128xf32>
    %211 = arith.addf %208, %210 : vector<64x128xf32>
    %c0_64 = arith.constant 0 : index
    %c896 = arith.constant 896 : index
    %212 = vector.load %arg4[%c0_64, %c896] : memref<64x1152xbf16, #tpu.memory_space<vmem>>, vector<64x64xbf16>
    %cst_65 = arith.constant 0.000000e+00 : f32
    %213 = vector.broadcast %cst_65 : f32 to vector<64x128xf32>
    %214 = arith.maximumf %211, %213 : vector<64x128xf32>
    %215 = arith.truncf %214 : vector<64x128xf32> to vector<64x128xbf16>
    %cst_66 = arith.constant dense<0.000000e+00> : vector<64x128xf32>
    %216 = tpu.matmul %212, %215, %cst_66 {dimension_numbers = #tpu.dot_dimension_numbers<[1], [0], [0], [1], [0, 0, 1, 1], [], []>} : vector<64x64xbf16>, vector<64x128xbf16>, vector<64x128xf32> -> vector<64x128xf32>
    %c0_67 = arith.constant 0 : index
    %c9 = arith.constant 9 : index
    %217 = vector.load %arg5[%c0_67, %c9] : memref<64x11xf32, #tpu.memory_space<vmem>>, vector<64x1xf32>
    %218 = vector.broadcast %217 : vector<64x1xf32> to vector<64x128xf32>
    %219 = arith.addf %216, %218 : vector<64x128xf32>
    %220 = arith.addf %203, %219 : vector<64x128xf32>
    %c0_68 = arith.constant 0 : index
    %c1024 = arith.constant 1024 : index
    %221 = vector.load %arg4[%c0_68, %c1024] : memref<64x1152xbf16, #tpu.memory_space<vmem>>, vector<64x64xbf16>
    %cst_69 = arith.constant 0.000000e+00 : f32
    %222 = vector.broadcast %cst_69 : f32 to vector<64x128xf32>
    %223 = arith.maximumf %220, %222 : vector<64x128xf32>
    %224 = arith.truncf %223 : vector<64x128xf32> to vector<64x128xbf16>
    %cst_70 = arith.constant dense<0.000000e+00> : vector<64x128xf32>
    %225 = tpu.matmul %221, %224, %cst_70 {dimension_numbers = #tpu.dot_dimension_numbers<[1], [0], [0], [1], [0, 0, 1, 1], [], []>} : vector<64x64xbf16>, vector<64x128xbf16>, vector<64x128xf32> -> vector<64x128xf32>
    %226 = vector.extract_strided_slice %225 {offsets = [0, 0], sizes = [8, 128], strides = [1, 1]} : vector<64x128xf32> to vector<8x128xf32>
    %c0_71 = arith.constant 0 : index
    %c10 = arith.constant 10 : index
    %227 = vector.load %arg5[%c0_71, %c10] : memref<64x11xf32, #tpu.memory_space<vmem>>, vector<8x1xf32>
    %228 = vector.broadcast %227 : vector<8x1xf32> to vector<8x128xf32>
    %229 = arith.addf %226, %228 : vector<8x128xf32>
    %230 = tpu.iota {dimensions = array<i32: 0>} : vector<8x128xi32>
    %c3_i32 = arith.constant 3 : i32
    %231 = vector.broadcast %c3_i32 : i32 to vector<8x128xi32>
    %232 = arith.cmpi slt, %230, %231 : vector<8x128xi32>
    %233 = arith.negf %229 : vector<8x128xf32>
    %234 = math.exp %233 : vector<8x128xf32>
    %cst_72 = arith.constant 1.000000e+00 : f32
    %235 = vector.broadcast %cst_72 : f32 to vector<8x128xf32>
    %236 = arith.addf %235, %234 : vector<8x128xf32>
    %237 = arith.divf %235, %236 : vector<8x128xf32>
    %cst_73 = arith.constant 0.000000e+00 : f32
    %238 = vector.broadcast %cst_73 : f32 to vector<8x128xf32>
    %239 = arith.maximumf %229, %238 : vector<8x128xf32>
    %240 = arith.select %232, %237, %239 : vector<8x128xi1>, vector<8x128xf32>
    %c0_74 = arith.constant 0 : index
    %c0_75 = arith.constant 0 : index
    %c0_76 = arith.constant 0 : index
    %241 = vector.load %arg6[%c0_74, %c0_75, %c0_76] : memref<1x8x128xf32, #tpu.memory_space<vmem>>, vector<1x8x128xf32>
    %242 = vector.shape_cast %241 : vector<1x8x128xf32> to vector<8x128xf32>
    %243 = vector.shape_cast %240 : vector<8x128xf32> to vector<1x8x128xf32>
    tpu.vector_store %arg6[%c0_74, %c0_75, %c0_76], %243 {strides = array<i32>} : memref<1x8x128xf32, #tpu.memory_space<vmem>>, vector<1x8x128xf32>,
    return
  }
  func.func @transform_0(%arg0: i32) -> (i32, i32, i32) {
    %c0_i32 = arith.constant 0 : i32
    %c0_i32_0 = arith.constant 0 : i32
    %c0_i32_1 = arith.constant 0 : i32
    return %arg0, %c0_i32, %c0_i32_0 : i32, i32, i32
  }
  func.func @transform_1(%arg0: i32) -> (i32, i32, i32) {
    %c0_i32 = arith.constant 0 : i32
    %c0_i32_0 = arith.constant 0 : i32
    %c0_i32_1 = arith.constant 0 : i32
    return %arg0, %c0_i32, %c0_i32_0 : i32, i32, i32
  }
  func.func @transform_2(%arg0: i32) -> (i32, i32, i32, i32) {
    %c0_i32 = arith.constant 0 : i32
    %c0_i32_0 = arith.constant 0 : i32
    %c0_i32_1 = arith.constant 0 : i32
    %c0_i32_2 = arith.constant 0 : i32
    return %arg0, %c0_i32, %c0_i32_0, %c0_i32_1 : i32, i32, i32, i32
  }
  func.func @transform_3(%arg0: i32) -> (i32, i32) {
    %c0_i32 = arith.constant 0 : i32
    %c0_i32_0 = arith.constant 0 : i32
    %c0_i32_1 = arith.constant 0 : i32
    return %c0_i32, %c0_i32_0 : i32, i32
  }
  func.func @transform_4(%arg0: i32) -> (i32, i32) {
    %c0_i32 = arith.constant 0 : i32
    %c0_i32_0 = arith.constant 0 : i32
    %c0_i32_1 = arith.constant 0 : i32
    return %c0_i32, %c0_i32_0 : i32, i32
  }
  func.func @transform_5(%arg0: i32) -> (i32, i32, i32) {
    %c0_i32 = arith.constant 0 : i32
    %c0_i32_0 = arith.constant 0 : i32
    %c0_i32_1 = arith.constant 0 : i32
    return %arg0, %c0_i32, %c0_i32_0 : i32, i32, i32
  }
}

</mosaic_0001>

<llo_original>
// kernel: pixelnerf_forward.1
$region0: #{pixelnerf_forward.1}
  #allocation0 [shape = 'u32[]', space=smem, size = 0x4, offset = 0x4, fixed_abs, tag = 'smem constant byte address 0x4 - core index']
  #allocation1 [shape = 'u32[144,128]{1,0:T(1,128)}', space=vmem, size = 0x12000, scoped, tag = 'internal scratch']
  %s0 = inlined_call_operand.vmem [shape: f32[2,6,5], index: 0, kind: input, shape index: {}]
  %s1 = inlined_call_operand.vmem [shape: f32[2,3,128], index: 1, kind: input, shape index: {}]
  %s2 = inlined_call_operand.vmem [shape: bf16[2,2,32,64], index: 2, kind: input, shape index: {}]
  %s3 = inlined_call_operand.hbm [shape: bf16[64,1152], index: 3, kind: input, shape index: {}]
  %s4 = inlined_call_operand.vmem [shape: f32[64,11], index: 4, kind: input, shape index: {}]
  %s5 = inlined_call_operand.vmem [shape: f32[2,8,128], index: 5, kind: output, shape index: {}]
  %s6 = sld [smem:[#allocation0]]
  $region57: #{pixelnerf_forward.1} parent=0
    _
  %s8 = ssub.s32 1, %s6
  %s9 = scalar_select 0, %s8, %s6
  $region1: #{pixelnerf_forward.1} parent=0
    #allocation2 [shape = 'u8[147456]{0}', space=vmem, size = 0x24000, scoped, tag = 'input window, operand 3, single buffered']
    #allocation3 [shape = 's32[2]{0}', space=sflag, size = 0x8, scoped, tag = 'scoped memory for pixelnerf_forward.1']
    %10 = vsyncpa [#allocation3], 0
    loop: start=0, step=1, limit=4
    $region2: #{pixelnerf_forward.1} parent=1 // loop_pre_header
      _
    $region3: #{pixelnerf_forward.1} parent=1 // loop_header
      %s12 = sphi 0, %s16
      %p13 = scmp.ge.s32.totalorder %s12, 4
      %s22 = sphi 0, %s24
      %s25 = sphi 0, %s22
      %s26 = sphi 0, %s25
      %s42 = sphi 0, %s26
      %s48 = sphi 0, %s50
      %s51 = sphi 0, %s48
      %s52 = sphi 0, %s51
      %s68 = sphi 0, %s52
      %s74 = sphi 0, %s76
      %s77 = sphi 0, %s74
      %s78 = sphi 0, %s77
      %s94 = sphi 0, %s78
      %s98 = sphi 0, %s98
      %s100 = sphi 0, %s98
      %s101 = sphi 0, %s100
      %s115 = sphi 0, %s101
      %s119 = sphi 0, %s119
      %s121 = sphi 0, %s119
      %s122 = sphi 0, %s121
      %s136 = sphi 0, %s122
      %s142 = sphi 0, %s144
      %s145 = sphi 0, %s142
      %s146 = sphi 0, %s145
      %s162 = sphi 0, %s146
    $region4: #{pixelnerf_forward.1} parent=1 // loop_header_branch
      %15 = sbr.rel (%p13) target = $region8
    $region5: #{pixelnerf_forward.1} parent=1 // loop_body
      %s17 = ssub.s32 %s12, 1
      %s18 = ssub.s32 %s12, 2
      %s19 = sadd.s32 %s12, 1
      %s20 = ssub.s32 %s12, %s19
      %p21 = scmp.eq.s32.totalorder %s20, 0
      %s23 = sadd.s32 %s22, 1
      %s24 = scalar_select %p21, %s22, %s23
      %p27 = pneg %p21
      %p28 = scmp.eq.s32.totalorder %s12, 1
      %p29 = por %p27, %p28
      %p30 = scmp.ne.s32.totalorder %s22, %s25
      %p31 = scmp.eq.s32.totalorder %s12, 0
      %p32 = por %p30, %p31
      %p33 = scmp.ne.s32.totalorder %s22, %s25
      %p34 = scmp.eq.s32.totalorder %s17, 1
      %p35 = por %p33, %p34
      %p36 = scmp.ne.s32.totalorder %s25, %s26
      %p37 = scmp.eq.s32.totalorder %s17, 0
      %p38 = por %p36, %p37
      %p39 = scmp.ne.s32.totalorder %s25, %s26
      %p40 = scmp.eq.s32.totalorder %s18, 1
      %p41 = por %p39, %p40
      %p43 = scmp.ne.s32.totalorder %s26, %s42
      %p44 = scmp.eq.s32.totalorder %s18, 0
      %p45 = por %p43, %p44
      %s46 = ssub.s32 %s12, %s19
      %p47 = scmp.eq.s32.totalorder %s46, 0
      %s49 = sadd.s32 %s48, 1
      %s50 = scalar_select %p47, %s48, %s49
      %p53 = pneg %p47
      %p54 = scmp.eq.s32.totalorder %s12, 1
      %p55 = por %p53, %p54
      %p56 = scmp.ne.s32.totalorder %s48, %s51
      %p57 = scmp.eq.s32.totalorder %s12, 0
      %p58 = por %p56, %p57
      %p59 = scmp.ne.s32.totalorder %s48, %s51
      %p60 = scmp.eq.s32.totalorder %s17, 1
      %p61 = por %p59, %p60
      %p62 = scmp.ne.s32.totalorder %s51, %s52
      %p63 = scmp.eq.s32.totalorder %s17, 0
      %p64 = por %p62, %p63
      %p65 = scmp.ne.s32.totalorder %s51, %s52
      %p66 = scmp.eq.s32.totalorder %s18, 1
      %p67 = por %p65, %p66
      %p69 = scmp.ne.s32.totalorder %s52, %s68
      %p70 = scmp.eq.s32.totalorder %s18, 0
      %p71 = por %p69, %p70
      %s72 = ssub.s32 %s12, %s19
      %p73 = scmp.eq.s32.totalorder %s72, 0
      %s75 = sadd.s32 %s74, 1
      %s76 = scalar_select %p73, %s74, %s75
      %p79 = pneg %p73
      %p80 = scmp.eq.s32.totalorder %s12, 1
      %p81 = por %p79, %p80
      %p82 = scmp.ne.s32.totalorder %s74, %s77
      %p83 = scmp.eq.s32.totalorder %s12, 0
      %p84 = por %p82, %p83
      %p85 = scmp.ne.s32.totalorder %s74, %s77
      %p86 = scmp.eq.s32.totalorder %s17, 1
      %p87 = por %p85, %p86
      %p88 = scmp.ne.s32.totalorder %s77, %s78
      %p89 = scmp.eq.s32.totalorder %s17, 0
      %p90 = por %p88, %p89
      %p91 = scmp.ne.s32.totalorder %s77, %s78
      %p92 = scmp.eq.s32.totalorder %s18, 1
      %p93 = por %p91, %p92
      %p95 = scmp.ne.s32.totalorder %s78, %s94
      %p96 = scmp.eq.s32.totalorder %s18, 0
      %p97 = por %p95, %p96
      %s99 = sadd.s32 %s98, 1
      %p102 = scmp.eq.s32.totalorder %s12, 1
      %p103 = scmp.ne.s32.totalorder %s98, %s100
      %p104 = scmp.eq.s32.totalorder %s12, 0
      %p105 = por %p103, %p104
      %p106 = scmp.ne.s32.totalorder %s98, %s100
      %p107 = scmp.eq.s32.totalorder %s17, 1
      %p108 = por %p106, %p107
      %p109 = scmp.ne.s32.totalorder %s100, %s101
      %p110 = scmp.eq.s32.totalorder %s17, 0
      %p111 = por %p109, %p110
      %p112 = scmp.ne.s32.totalorder %s100, %s101
      %p113 = scmp.eq.s32.totalorder %s18, 1
      %p114 = por %p112, %p113
      %p116 = scmp.ne.s32.totalorder %s101, %s115
      %p117 = scmp.eq.s32.totalorder %s18, 0
      %p118 = por %p116, %p117
      %s120 = sadd.s32 %s119, 1
      %p123 = scmp.eq.s32.totalorder %s12, 1
      %p124 = scmp.ne.s32.totalorder %s119, %s121
      %p125 = scmp.eq.s32.totalorder %s12, 0
      %p126 = por %p124, %p125
      %p127 = scmp.ne.s32.totalorder %s119, %s121
      %p128 = scmp.eq.s32.totalorder %s17, 1
      %p129 = por %p127, %p128
      %p130 = scmp.ne.s32.totalorder %s121, %s122
      %p131 = scmp.eq.s32.totalorder %s17, 0
      %p132 = por %p130, %p131
      %p133 = scmp.ne.s32.totalorder %s121, %s122
      %p134 = scmp.eq.s32.totalorder %s18, 1
      %p135 = por %p133, %p134
      %p137 = scmp.ne.s32.totalorder %s122, %s136
      %p138 = scmp.eq.s32.totalorder %s18, 0
      %p139 = por %p137, %p138
      %s140 = ssub.s32 %s12, %s19
      %p141 = scmp.eq.s32.totalorder %s140, 0
      %s143 = sadd.s32 %s142, 1
      %s144 = scalar_select %p141, %s142, %s143
      %p147 = pneg %p141
      %p148 = scmp.eq.s32.totalorder %s12, 1
      %p149 = por %p147, %p148
      %p150 = scmp.ne.s32.totalorder %s142, %s145
      %p151 = scmp.eq.s32.totalorder %s12, 0
      %p152 = por %p150, %p151
      %p153 = scmp.ne.s32.totalorder %s142, %s145
      %p154 = scmp.eq.s32.totalorder %s17, 1
      %p155 = por %p153, %p154
      %p156 = scmp.ne.s32.totalorder %s145, %s146
      %p157 = scmp.eq.s32.totalorder %s17, 0
      %p158 = por %p156, %p157
      %p159 = scmp.ne.s32.totalorder %s145, %s146
      %p160 = scmp.eq.s32.totalorder %s18, 1
      %p161 = por %p159, %p160
      %p163 = scmp.ne.s32.totalorder %s146, %s162
      %p164 = scmp.eq.s32.totalorder %s18, 0
      %p165 = por %p163, %p164
      %p166 = scmp.le.s32.totalorder 1, %s12
      %p167 = scmp.lt.s32.totalorder %s12, 3
      %p168 = pnand %p166, %p167
      %p169 = pneg %p168
      // Predicated region
      $region9: #{pixelnerf_forward.1} parent=5 // pred_check
        _
      $region10: #{pixelnerf_forward.1} parent=5 // pred_check_branch
        %171 = sbr.rel (%p168) target = $region12
      $region11: #{pixelnerf_forward.1} parent=5 // pred_region
        %s172 = ssub.s32 %s12, 1
        // Predicated region
        $region13: #{pixelnerf_forward.1} parent=11 // pred_check
          %p173 = pneg %p111
        $region14: #{pixelnerf_forward.1} parent=11 // pred_check_branch
          %175 = sbr.rel (%p173) target = $region16
        $region15: #{pixelnerf_forward.1} parent=11 // pred_region
          %s177 = ssub.s32 4608, 4608
          %178 = vsyncadd [#allocation3], %s177
          %s179 = sshll.u32 [#allocation2], 4
          %s180 = int_to_ptr.vmem [resolvable:$true] %s179
          %185 = dma.hbm_to_vmem [thread:$0]  %s3, 4608, %s180, [#allocation3], 576, 576, 36
        $region16: #{pixelnerf_forward.1} parent=11 // pred_fallthru
          _
        // Predicated region
        $region17: #{pixelnerf_forward.1} parent=11 // pred_check
          %p186 = pneg %p132
        $region18: #{pixelnerf_forward.1} parent=11 // pred_check_branch
          %188 = sbr.rel (%p186) target = $region20
        $region19: #{pixelnerf_forward.1} parent=11 // pred_region
          _
        $region20: #{pixelnerf_forward.1} parent=11 // pred_fallthru
          _
      $region12: #{pixelnerf_forward.1} parent=5 // pred_fallthru
        _
      %p189 = scmp.lt.s32.totalorder %s12, 2
      // Predicated region
      $region21: #{pixelnerf_forward.1} parent=5 // pred_check
        %p190 = pneg %p189
      $region22: #{pixelnerf_forward.1} parent=5 // pred_check_branch
        %192 = sbr.rel (%p190) target = $region24
      $region23: #{pixelnerf_forward.1} parent=5 // pred_region
        // Predicated region
        $region25: #{pixelnerf_forward.1} parent=23 // pred_check
          %p193 = pneg %p32
        $region26: #{pixelnerf_forward.1} parent=23 // pred_check_branch
          %195 = sbr.rel (%p193) target = $region28
        $region27: #{pixelnerf_forward.1} parent=23 // pred_region
          %p196 = scmp.lt.s32.totalorder %s12, 1
          %s197 = scalar_select %p196, %s12, 1
          %s198 = smul.addr %s197, 8
          %s199 = scalar_lea.vmem %s0, %s198
        $region28: #{pixelnerf_forward.1} parent=23 // pred_fallthru
          _
        // Predicated region
        $region29: #{pixelnerf_forward.1} parent=23 // pred_check
          %p200 = pneg %p58
        $region30: #{pixelnerf_forward.1} parent=23 // pred_check_branch
          %202 = sbr.rel (%p200) target = $region32
        $region31: #{pixelnerf_forward.1} parent=23 // pred_region
          %p203 = scmp.lt.s32.totalorder %s12, 1
          %s204 = scalar_select %p203, %s12, 1
          %s205 = smul.addr %s204, 4
          %s206 = scalar_lea.vmem %s1, %s205
        $region32: #{pixelnerf_forward.1} parent=23 // pred_fallthru
          _
        // Predicated region
        $region33: #{pixelnerf_forward.1} parent=23 // pred_check
          %p207 = pneg %p84
        $region34: #{pixelnerf_forward.1} parent=23 // pred_check_branch
          %209 = sbr.rel (%p207) target = $region36
        $region35: #{pixelnerf_forward.1} parent=23 // pred_region
          %p210 = scmp.lt.s32.totalorder %s12, 1
          %s211 = scalar_select %p210, %s12, 1
          %s212 = smul.addr %s211, 8
          %s213 = smul.addr %s212, 4
          %s214 = scalar_lea.vmem %s2, %s213
        $region36: #{pixelnerf_forward.1} parent=23 // pred_fallthru
          _
      $region24: #{pixelnerf_forward.1} parent=5 // pred_fallthru
        _
      %p215 = scmp.le.s32.totalorder 1, %s12
      %p216 = scmp.lt.s32.totalorder %s12, 3
      %p217 = pnand %p215, %p216
      %p218 = pneg %p217
      // Predicated region
      $region37: #{pixelnerf_forward.1} parent=5 // pred_check
        _
      $region38: #{pixelnerf_forward.1} parent=5 // pred_check_branch
        %220 = sbr.rel (%p217) target = $region40
      $region39: #{pixelnerf_forward.1} parent=5 // pred_region
        %s221 = ssub.s32 %s12, 1
        // Predicated region
        $region41: #{pixelnerf_forward.1} parent=39 // pred_check
          %p222 = pneg %p111
        $region42: #{pixelnerf_forward.1} parent=39 // pred_check_branch
          %224 = sbr.rel (%p222) target = $region44
        $region43: #{pixelnerf_forward.1} parent=39 // pred_region
          %225 = dma.done [#allocation3], 4608
        $region44: #{pixelnerf_forward.1} parent=39 // pred_fallthru
          _
        %p226 = scmp.lt.s32.totalorder %s17, 1
        %s227 = scalar_select %p226, %s17, 1
        %s228 = smul.addr %s227, 8
        %s229 = scalar_lea.vmem %s0, %s228
        %p230 = pneg %p38
        %p231 = pneg %p35
        %p232 = scmp.lt.s32.totalorder %s17, 1
        %s233 = scalar_select %p232, %s17, 1
        %s234 = smul.addr %s233, 4
        %s235 = scalar_lea.vmem %s1, %s234
        %p236 = pneg %p64
        %p237 = pneg %p61
        %p238 = scmp.lt.s32.totalorder %s17, 1
        %s239 = scalar_select %p238, %s17, 1
        %s240 = smul.addr %s239, 8
        %s241 = smul.addr %s240, 4
        %s242 = scalar_lea.vmem %s2, %s241
        %p243 = pneg %p90
        %p244 = pneg %p87
        %p245 = pneg %p111
        %p246 = pneg %p108
        %p247 = pneg %p132
        %p248 = pneg %p129
        %p249 = pneg %p158
        %p250 = pneg %p155
        %p251 = scmp.lt.s32.totalorder %s17, 1
        %s252 = scalar_select %p251, %s17, 1
        %s253 = smul.addr %s252, 8
        %s254 = scalar_lea.vmem %s5, %s253
        %p255 = scmp.lt.s32.totalorder %s17, 1
        %s256 = scalar_select %p255, %s17, 1
        %s257 = smul.addr %s256, 8
        %s258 = scalar_lea.vmem %s0, %s257
        %p259 = scmp.lt.s32.totalorder %s17, 1
        %s260 = scalar_select %p259, %s17, 1
        %s261 = smul.addr %s260, 4
        %s262 = scalar_lea.vmem %s1, %s261
        %p263 = scmp.lt.s32.totalorder %s17, 1
        %s264 = scalar_select %p263, %s17, 1
        %s265 = smul.addr %s264, 8
        %s266 = smul.addr %s265, 4
        %s267 = scalar_lea.vmem %s2, %s266
        %p268 = scmp.lt.s32.totalorder %s17, 1
        %s269 = scalar_select %p268, %s17, 1
        %s270 = smul.addr %s269, 8
        %s271 = scalar_lea.vmem %s5, %s270
        %v273 = vld [vmem:[%s258] sm:$0x3f]
        %v274 = vld [vmem:[%s262] sm:$0x7]
        %276 = vset.pattern.permute.xlu0 0
        %277 = vperm.xlu0 %276, %v273
        %v278 = vpop.permute.xlu0 %277
        %v280 = vlaneseq
        %v281 = vshrl.u32 %v280, 7
        %v282 = vsub.s32 0, %v281
        %v283 = vrot.slane %v274, %v282
        %v284 = vmul.f32 %v278, %v283
        %285 = vset.pattern.permute.xlu0 1
        %286 = vperm.xlu0 %285, %v273
        %v287 = vpop.permute.xlu0 %286
        %v289 = vlaneseq
        %v290 = vshrl.u32 %v289, 7
        %v291 = vsub.s32 1, %v290
        %v292 = vrot.slane %v274, %v291
        %v293 = vmul.f32 %v287, %v292
        %v294 = vadd.f32 %v284, %v293
        %295 = vset.pattern.permute.xlu0 2
        %296 = vperm.xlu0 %295, %v273
        %v297 = vpop.permute.xlu0 %296
        %v299 = vlaneseq
        %v300 = vshrl.u32 %v299, 7
        %v301 = vsub.s32 2, %v300
        %v302 = vrot.slane %v274, %v301
        %v303 = vmul.f32 %v297, %v302
        %v304 = vadd.f32 %v294, %v303
        %305 = vset.pattern.permute.xlu0 3
        %306 = vperm.xlu0 %305, %v273
        %v307 = vpop.permute.xlu0 %306
        %v309 = vadd.f32 %v304, %v307
        %v310 = vsub.f32 0.0, %v304
        %v311 = vadd.f32 %v309, 1e-07
        %v312 = vrcp.pop %v311
        %v313 = vmul.f32 1.0, %v312
        %v315 = vrot.slane %v313, 4
        %v317 = vmul.f32 %v309, %v315
        %318 = vset.pattern.permute.xlu0 4
        %319 = vperm.xlu0 %318, %v273
        %v320 = vpop.permute.xlu0 %319
        %v322 = vadd.f32 %v317, %v320
        %v323 = vmax.f32 %v322, 0.0
        %v324 = vmin.f32 %v323, 7.0
        %v325 = vrot.slane %v313, 2
        %v327 = vmul.f32 %v309, %v325
        %v328 = vadd.f32 %v327, %v320
        %v329 = vmax.f32 %v328, 0.0
        %v330 = vmin.f32 %v329, 7.0
        %v331 = vfloor.f32 %v324
        %v332 = vfloor.f32 %v330
        %v333 = vsub.f32 %v324, %v331
        %v334 = vsub.f32 %v330, %v332
        %v335 = vadd.f32 %v331, 1.0
        %v336 = vmin.f32 %v335, 7.0
        %v337 = vadd.f32 %v332, 1.0
        %v338 = vmin.f32 %v337, 7.0
        %v339 = vlaneseq
        %v340 = vshrl.u32 %v339, 7
        %v341 = vadd.s32 %v340, 8
        %v342 = vadd.s32 %v340, 16
        %v343 = vadd.s32 %v340, 24
        %v344 = vadd.s32 %v340, 32
        %v345 = vadd.s32 %v340, 40
        %v346 = vadd.s32 %v340, 48
        %v347 = vadd.s32 %v340, 56
        %v348 = vsub.f32 1.0, %v334
        %v349 = vsub.f32 1.0, %v333
        %v351 = vrot.slane %v349, 6
        %v353 = vmul.f32 %v348, %v351
        %v354 = vmul.f32 %v332, 8.0
        %v356 = vrot.slane %v331, 6
        %v358 = vadd.f32 %v354, %v356
        %v359 = vcvt.f32.s32.to.zero.pseudo %v358
        %v361 = vunpack.c.l.s4 1966171168
        %v362 = vunpack.c.0.s8 %v361
        %v363 = vlaneseq
        %v364 = vshrl.u32 %v363, 7
        %v365 = vsub.s32 %v362, %v364
        %v366 = vrot.slane %v359, %v365
        %v367 = vcombine.high %v366, %v366
        %v369 = vunpack.c.l.s4 1966171168
        %v370 = vunpack.c.0.s8 %v369
        %v371 = vlaneseq
        %v372 = vshrl.u32 %v371, 7
        %v373 = vsub.s32 %v370, %v372
        %v374 = vrot.slane %v366, %v373
        %v376 = vunpack.c.l.s4 1966171168
        %v377 = vunpack.c.0.s8 %v376
        %v378 = vlaneseq
        %v379 = vshrl.u32 %v378, 7
        %v380 = vsub.s32 %v377, %v379
        %v381 = vrot.slane %v367, %v380
        %v382 = vcombine.high %v374, %v374
        %v383 = vcombine.high %v381, %v381
        %v384 = vlaneseq
        %v385 = vshrl.u32 %v384, 7
        %v386 = vsub.s32 0, %v385
        %v387 = vrot.slane %v382, %v386
        %v388 = vlaneseq
        %v389 = vshrl.u32 %v388, 7
        %v390 = vsub.s32 0, %v389
        %v391 = vrot.slane %v383, %v390
        %vm392 = vcmp.eq.s32.totalorder %v340, %v387
        %vm393 = vcmp.eq.s32.totalorder %v341, %v387
        %vm394 = vcmp.eq.s32.totalorder %v342, %v387
        %vm395 = vcmp.eq.s32.totalorder %v343, %v387
        %vm396 = vcmp.eq.s32.totalorder %v344, %v387
        %vm397 = vcmp.eq.s32.totalorder %v345, %v387
        %vm398 = vcmp.eq.s32.totalorder %v346, %v387
        %vm399 = vcmp.eq.s32.totalorder %v347, %v387
        %vm400 = vcmp.eq.s32.totalorder %v340, %v391
        %vm401 = vcmp.eq.s32.totalorder %v341, %v391
        %vm402 = vcmp.eq.s32.totalorder %v342, %v391
        %vm403 = vcmp.eq.s32.totalorder %v343, %v391
        %vm404 = vcmp.eq.s32.totalorder %v344, %v391
        %vm405 = vcmp.eq.s32.totalorder %v345, %v391
        %vm406 = vcmp.eq.s32.totalorder %v346, %v391
        %vm407 = vcmp.eq.s32.totalorder %v347, %v391
        %v410 = vunpack.c.l.s4 1966171168
        %v411 = vunpack.c.0.s8 %v410
        %v412 = vlaneseq
        %v413 = vshrl.u32 %v412, 7
        %v414 = vsub.s32 %v411, %v413
        %v415 = vrot.slane %v353, %v414
        %v416 = vcombine.high %v415, %v415
        %v418 = vunpack.c.l.s4 1966171168
        %v419 = vunpack.c.0.s8 %v418
        %v420 = vlaneseq
        %v421 = vshrl.u32 %v420, 7
        %v422 = vsub.s32 %v419, %v421
        %v423 = vrot.slane %v415, %v422
        %v425 = vunpack.c.l.s4 1966171168
        %v426 = vunpack.c.0.s8 %v425
        %v427 = vlaneseq
        %v428 = vshrl.u32 %v427, 7
        %v429 = vsub.s32 %v426, %v428
        %v430 = vrot.slane %v416, %v429
        %v431 = vcombine.high %v423, %v423
        %v432 = vcombine.high %v430, %v430
        %v433 = vlaneseq
        %v434 = vshrl.u32 %v433, 7
        %v435 = vsub.s32 0, %v434
        %v436 = vrot.slane %v431, %v435
        %v437 = vlaneseq
        %v438 = vshrl.u32 %v437, 7
        %v439 = vsub.s32 0, %v438
        %v440 = vrot.slane %v432, %v439
        %v443 = vsel %vm392, %v436, 0.0
        %v444 = vsel %vm393, %v436, 0.0
        %v445 = vsel %vm394, %v436, 0.0
        %v446 = vsel %vm395, %v436, 0.0
        %v447 = vsel %vm396, %v436, 0.0
        %v448 = vsel %vm397, %v436, 0.0
        %v449 = vsel %vm398, %v436, 0.0
        %v450 = vsel %vm399, %v436, 0.0
        %v451 = vsel %vm400, %v440, 0.0
        %v452 = vsel %vm401, %v440, 0.0
        %v453 = vsel %vm402, %v440, 0.0
        %v454 = vsel %vm403, %v440, 0.0
        %v455 = vsel %vm404, %v440, 0.0
        %v456 = vsel %vm405, %v440, 0.0
        %v457 = vsel %vm406, %v440, 0.0
        %v458 = vsel %vm407, %v440, 0.0
        %v460 = vrot.slane %v333, 6
        %v462 = vmul.f32 %v348, %v460
        %v464 = vrot.slane %v336, 6
        %v466 = vadd.f32 %v354, %v464
        %v467 = vcvt.f32.s32.to.zero.pseudo %v466
        %v469 = vunpack.c.l.s4 1966171168
        %v470 = vunpack.c.0.s8 %v469
        %v471 = vlaneseq
        %v472 = vshrl.u32 %v471, 7
        %v473 = vsub.s32 %v470, %v472
        %v474 = vrot.slane %v467, %v473
        %v475 = vcombine.high %v474, %v474
        %v477 = vunpack.c.l.s4 1966171168
        %v478 = vunpack.c.0.s8 %v477
        %v479 = vlaneseq
        %v480 = vshrl.u32 %v479, 7
        %v481 = vsub.s32 %v478, %v480
        %v482 = vrot.slane %v474, %v481
        %v484 = vunpack.c.l.s4 1966171168
        %v485 = vunpack.c.0.s8 %v484
        %v486 = vlaneseq
        %v487 = vshrl.u32 %v486, 7
        %v488 = vsub.s32 %v485, %v487
        %v489 = vrot.slane %v475, %v488
        %v490 = vcombine.high %v482, %v482
        %v491 = vcombine.high %v489, %v489
        %v492 = vlaneseq
        %v493 = vshrl.u32 %v492, 7
        %v494 = vsub.s32 0, %v493
        %v495 = vrot.slane %v490, %v494
        %v496 = vlaneseq
        %v497 = vshrl.u32 %v496, 7
        %v498 = vsub.s32 0, %v497
        %v499 = vrot.slane %v491, %v498
        %vm500 = vcmp.eq.s32.totalorder %v340, %v495
        %vm501 = vcmp.eq.s32.totalorder %v341, %v495
        %vm502 = vcmp.eq.s32.totalorder %v342, %v495
        %vm503 = vcmp.eq.s32.totalorder %v343, %v495
        %vm504 = vcmp.eq.s32.totalorder %v344, %v495
        %vm505 = vcmp.eq.s32.totalorder %v345, %v495
        %vm506 = vcmp.eq.s32.totalorder %v346, %v495
        %vm507 = vcmp.eq.s32.totalorder %v347, %v495
        %vm508 = vcmp.eq.s32.totalorder %v340, %v499
        %vm509 = vcmp.eq.s32.totalorder %v341, %v499
        %vm510 = vcmp.eq.s32.totalorder %v342, %v499
        %vm511 = vcmp.eq.s32.totalorder %v343, %v499
        %vm512 = vcmp.eq.s32.totalorder %v344, %v499
        %vm513 = vcmp.eq.s32.totalorder %v345, %v499
        %vm514 = vcmp.eq.s32.totalorder %v346, %v499
        %vm515 = vcmp.eq.s32.totalorder %v347, %v499
        %v518 = vunpack.c.l.s4 1966171168
        %v519 = vunpack.c.0.s8 %v518
        %v520 = vlaneseq
        %v521 = vshrl.u32 %v520, 7
        %v522 = vsub.s32 %v519, %v521
        %v523 = vrot.slane %v462, %v522
        %v524 = vcombine.high %v523, %v523
        %v526 = vunpack.c.l.s4 1966171168
        %v527 = vunpack.c.0.s8 %v526
        %v528 = vlaneseq
        %v529 = vshrl.u32 %v528, 7
        %v530 = vsub.s32 %v527, %v529
        %v531 = vrot.slane %v523, %v530
        %v533 = vunpack.c.l.s4 1966171168
        %v534 = vunpack.c.0.s8 %v533
        %v535 = vlaneseq
        %v536 = vshrl.u32 %v535, 7
        %v537 = vsub.s32 %v534, %v536
        %v538 = vrot.slane %v524, %v537
        %v539 = vcombine.high %v531, %v531
        %v540 = vcombine.high %v538, %v538
        %v541 = vlaneseq
        %v542 = vshrl.u32 %v541, 7
        %v543 = vsub.s32 0, %v542
        %v544 = vrot.slane %v539, %v543
        %v545 = vlaneseq
        %v546 = vshrl.u32 %v545, 7
        %v547 = vsub.s32 0, %v546
        %v548 = vrot.slane %v540, %v547
        %v551 = vsel %vm500, %v544, 0.0
        %v552 = vsel %vm501, %v544, 0.0
        %v553 = vsel %vm502, %v544, 0.0
        %v554 = vsel %vm503, %v544, 0.0
        %v555 = vsel %vm504, %v544, 0.0
        %v556 = vsel %vm505, %v544, 0.0
        %v557 = vsel %vm506, %v544, 0.0
        %v558 = vsel %vm507, %v544, 0.0
        %v559 = vsel %vm508, %v548, 0.0
        %v560 = vsel %vm509, %v548, 0.0
        %v561 = vsel %vm510, %v548, 0.0
        %v562 = vsel %vm511, %v548, 0.0
        %v563 = vsel %vm512, %v548, 0.0
        %v564 = vsel %vm513, %v548, 0.0
        %v565 = vsel %vm514, %v548, 0.0
        %v566 = vsel %vm515, %v548, 0.0
        %v567 = vadd.f32 %v443, %v551
        %v568 = vadd.f32 %v444, %v552
        %v569 = vadd.f32 %v445, %v553
        %v570 = vadd.f32 %v446, %v554
        %v571 = vadd.f32 %v447, %v555
        %v572 = vadd.f32 %v448, %v556
        %v573 = vadd.f32 %v449, %v557
        %v574 = vadd.f32 %v450, %v558
        %v575 = vadd.f32 %v451, %v559
        %v576 = vadd.f32 %v452, %v560
        %v577 = vadd.f32 %v453, %v561
        %v578 = vadd.f32 %v454, %v562
        %v579 = vadd.f32 %v455, %v563
        %v580 = vadd.f32 %v456, %v564
        %v581 = vadd.f32 %v457, %v565
        %v582 = vadd.f32 %v458, %v566
        %v583 = vmul.f32 %v334, %v351
        %v584 = vmul.f32 %v338, 8.0
        %v585 = vadd.f32 %v584, %v356
        %v586 = vcvt.f32.s32.to.zero.pseudo %v585
        %v588 = vunpack.c.l.s4 1966171168
        %v589 = vunpack.c.0.s8 %v588
        %v590 = vlaneseq
        %v591 = vshrl.u32 %v590, 7
        %v592 = vsub.s32 %v589, %v591
        %v593 = vrot.slane %v586, %v592
        %v594 = vcombine.high %v593, %v593
        %v596 = vunpack.c.l.s4 1966171168
        %v597 = vunpack.c.0.s8 %v596
        %v598 = vlaneseq
        %v599 = vshrl.u32 %v598, 7
        %v600 = vsub.s32 %v597, %v599
        %v601 = vrot.slane %v593, %v600
        %v603 = vunpack.c.l.s4 1966171168
        %v604 = vunpack.c.0.s8 %v603
        %v605 = vlaneseq
        %v606 = vshrl.u32 %v605, 7
        %v607 = vsub.s32 %v604, %v606
        %v608 = vrot.slane %v594, %v607
        %v609 = vcombine.high %v601, %v601
        %v610 = vcombine.high %v608, %v608
        %v611 = vlaneseq
        %v612 = vshrl.u32 %v611, 7
        %v613 = vsub.s32 0, %v612
        %v614 = vrot.slane %v609, %v613
        %v615 = vlaneseq
        %v616 = vshrl.u32 %v615, 7
        %v617 = vsub.s32 0, %v616
        %v618 = vrot.slane %v610, %v617
        %vm619 = vcmp.eq.s32.totalorder %v340, %v614
        %vm620 = vcmp.eq.s32.totalorder %v341, %v614
        %vm621 = vcmp.eq.s32.totalorder %v342, %v614
        %vm622 = vcmp.eq.s32.totalorder %v343, %v614
        %vm623 = vcmp.eq.s32.totalorder %v344, %v614
        %vm624 = vcmp.eq.s32.totalorder %v345, %v614
        %vm625 = vcmp.eq.s32.totalorder %v346, %v614
        %vm626 = vcmp.eq.s32.totalorder %v347, %v614
        %vm627 = vcmp.eq.s32.totalorder %v340, %v618
        %vm628 = vcmp.eq.s32.totalorder %v341, %v618
        %vm629 = vcmp.eq.s32.totalorder %v342, %v618
        %vm630 = vcmp.eq.s32.totalorder %v343, %v618
        %vm631 = vcmp.eq.s32.totalorder %v344, %v618
        %vm632 = vcmp.eq.s32.totalorder %v345, %v618
        %vm633 = vcmp.eq.s32.totalorder %v346, %v618
        %vm634 = vcmp.eq.s32.totalorder %v347, %v618
        %v637 = vunpack.c.l.s4 1966171168
        %v638 = vunpack.c.0.s8 %v637
        %v639 = vlaneseq
        %v640 = vshrl.u32 %v639, 7
        %v641 = vsub.s32 %v638, %v640
        %v642 = vrot.slane %v583, %v641
        %v643 = vcombine.high %v642, %v642
        %v645 = vunpack.c.l.s4 1966171168
        %v646 = vunpack.c.0.s8 %v645
        %v647 = vlaneseq
        %v648 = vshrl.u32 %v647, 7
        %v649 = vsub.s32 %v646, %v648
        %v650 = vrot.slane %v642, %v649
        %v652 = vunpack.c.l.s4 1966171168
        %v653 = vunpack.c.0.s8 %v652
        %v654 = vlaneseq
        %v655 = vshrl.u32 %v654, 7
        %v656 = vsub.s32 %v653, %v655
        %v657 = vrot.slane %v643, %v656
        %v658 = vcombine.high %v650, %v650
        %v659 = vcombine.high %v657, %v657
        %v660 = vlaneseq
        %v661 = vshrl.u32 %v660, 7
        %v662 = vsub.s32 0, %v661
        %v663 = vrot.slane %v658, %v662
        %v664 = vlaneseq
        %v665 = vshrl.u32 %v664, 7
        %v666 = vsub.s32 0, %v665
        %v667 = vrot.slane %v659, %v666
        %v670 = vsel %vm619, %v663, 0.0
        %v671 = vsel %vm620, %v663, 0.0
        %v672 = vsel %vm621, %v663, 0.0
        %v673 = vsel %vm622, %v663, 0.0
        %v674 = vsel %vm623, %v663, 0.0
        %v675 = vsel %vm624, %v663, 0.0
        %v676 = vsel %vm625, %v663, 0.0
        %v677 = vsel %vm626, %v663, 0.0
        %v678 = vsel %vm627, %v667, 0.0
        %v679 = vsel %vm628, %v667, 0.0
        %v680 = vsel %vm629, %v667, 0.0
        %v681 = vsel %vm630, %v667, 0.0
        %v682 = vsel %vm631, %v667, 0.0
        %v683 = vsel %vm632, %v667, 0.0
        %v684 = vsel %vm633, %v667, 0.0
        %v685 = vsel %vm634, %v667, 0.0
        %v686 = vadd.f32 %v567, %v670
        %v687 = vadd.f32 %v568, %v671
        %v688 = vadd.f32 %v569, %v672
        %v689 = vadd.f32 %v570, %v673
        %v690 = vadd.f32 %v571, %v674
        %v691 = vadd.f32 %v572, %v675
        %v692 = vadd.f32 %v573, %v676
        %v693 = vadd.f32 %v574, %v677
        %v694 = vadd.f32 %v575, %v678
        %v695 = vadd.f32 %v576, %v679
        %v696 = vadd.f32 %v577, %v680
        %v697 = vadd.f32 %v578, %v681
        %v698 = vadd.f32 %v579, %v682
        %v699 = vadd.f32 %v580, %v683
        %v700 = vadd.f32 %v581, %v684
        %v701 = vadd.f32 %v582, %v685
        %v702 = vmul.f32 %v334, %v460
        %v703 = vadd.f32 %v584, %v464
        %v704 = vcvt.f32.s32.to.zero.pseudo %v703
        %v706 = vunpack.c.l.s4 1966171168
        %v707 = vunpack.c.0.s8 %v706
        %v708 = vlaneseq
        %v709 = vshrl.u32 %v708, 7
        %v710 = vsub.s32 %v707, %v709
        %v711 = vrot.slane %v704, %v710
        %v712 = vcombine.high %v711, %v711
        %v714 = vunpack.c.l.s4 1966171168
        %v715 = vunpack.c.0.s8 %v714
        %v716 = vlaneseq
        %v717 = vshrl.u32 %v716, 7
        %v718 = vsub.s32 %v715, %v717
        %v719 = vrot.slane %v711, %v718
        %v721 = vunpack.c.l.s4 1966171168
        %v722 = vunpack.c.0.s8 %v721
        %v723 = vlaneseq
        %v724 = vshrl.u32 %v723, 7
        %v725 = vsub.s32 %v722, %v724
        %v726 = vrot.slane %v712, %v725
        %v727 = vcombine.high %v719, %v719
        %v728 = vcombine.high %v726, %v726
        %v729 = vlaneseq
        %v730 = vshrl.u32 %v729, 7
        %v731 = vsub.s32 0, %v730
        %v732 = vrot.slane %v727, %v731
        %v733 = vlaneseq
        %v734 = vshrl.u32 %v733, 7
        %v735 = vsub.s32 0, %v734
        %v736 = vrot.slane %v728, %v735
        %vm737 = vcmp.eq.s32.totalorder %v340, %v732
        %vm738 = vcmp.eq.s32.totalorder %v341, %v732
        %vm739 = vcmp.eq.s32.totalorder %v342, %v732
        %vm740 = vcmp.eq.s32.totalorder %v343, %v732
        %vm741 = vcmp.eq.s32.totalorder %v344, %v732
        %vm742 = vcmp.eq.s32.totalorder %v345, %v732
        %vm743 = vcmp.eq.s32.totalorder %v346, %v732
        %vm744 = vcmp.eq.s32.totalorder %v347, %v732
        %vm745 = vcmp.eq.s32.totalorder %v340, %v736
        %vm746 = vcmp.eq.s32.totalorder %v341, %v736
        %vm747 = vcmp.eq.s32.totalorder %v342, %v736
        %vm748 = vcmp.eq.s32.totalorder %v343, %v736
        %vm749 = vcmp.eq.s32.totalorder %v344, %v736
        %vm750 = vcmp.eq.s32.totalorder %v345, %v736
        %vm751 = vcmp.eq.s32.totalorder %v346, %v736
        %vm752 = vcmp.eq.s32.totalorder %v347, %v736
        %v755 = vunpack.c.l.s4 1966171168
        %v756 = vunpack.c.0.s8 %v755
        %v757 = vlaneseq
        %v758 = vshrl.u32 %v757, 7
        %v759 = vsub.s32 %v756, %v758
        %v760 = vrot.slane %v702, %v759
        %v761 = vcombine.high %v760, %v760
        %v763 = vunpack.c.l.s4 1966171168
        %v764 = vunpack.c.0.s8 %v763
        %v765 = vlaneseq
        %v766 = vshrl.u32 %v765, 7
        %v767 = vsub.s32 %v764, %v766
        %v768 = vrot.slane %v760, %v767
        %v770 = vunpack.c.l.s4 1966171168
        %v771 = vunpack.c.0.s8 %v770
        %v772 = vlaneseq
        %v773 = vshrl.u32 %v772, 7
        %v774 = vsub.s32 %v771, %v773
        %v775 = vrot.slane %v761, %v774
        %v776 = vcombine.high %v768, %v768
        %v777 = vcombine.high %v775, %v775
        %v778 = vlaneseq
        %v779 = vshrl.u32 %v778, 7
        %v780 = vsub.s32 0, %v779
        %v781 = vrot.slane %v776, %v780
        %v782 = vlaneseq
        %v783 = vshrl.u32 %v782, 7
        %v784 = vsub.s32 0, %v783
        %v785 = vrot.slane %v777, %v784
        %v788 = vsel %vm737, %v781, 0.0
        %v789 = vsel %vm738, %v781, 0.0
        %v790 = vsel %vm739, %v781, 0.0
        %v791 = vsel %vm740, %v781, 0.0
        %v792 = vsel %vm741, %v781, 0.0
        %v793 = vsel %vm742, %v781, 0.0
        %v794 = vsel %vm743, %v781, 0.0
        %v795 = vsel %vm744, %v781, 0.0
        %v796 = vsel %vm745, %v785, 0.0
        %v797 = vsel %vm746, %v785, 0.0
        %v798 = vsel %vm747, %v785, 0.0
        %v799 = vsel %vm748, %v785, 0.0
        %v800 = vsel %vm749, %v785, 0.0
        %v801 = vsel %vm750, %v785, 0.0
        %v802 = vsel %vm751, %v785, 0.0
        %v803 = vsel %vm752, %v785, 0.0
        %v804 = vadd.f32 %v686, %v788
        %v805 = vadd.f32 %v687, %v789
        %v806 = vadd.f32 %v688, %v790
        %v807 = vadd.f32 %v689, %v791
        %v808 = vadd.f32 %v690, %v792
        %v809 = vadd.f32 %v691, %v793
        %v810 = vadd.f32 %v692, %v794
        %v811 = vadd.f32 %v693, %v795
        %v812 = vadd.f32 %v694, %v796
        %v813 = vadd.f32 %v695, %v797
        %v814 = vadd.f32 %v696, %v798
        %v815 = vadd.f32 %v697, %v799
        %v816 = vadd.f32 %v698, %v800
        %v817 = vadd.f32 %v699, %v801
        %v818 = vadd.f32 %v700, %v802
        %v819 = vadd.f32 %v701, %v803
        %v820 = vpack.c.bf16 %v805, %v804
        %v821 = vpack.c.bf16 %v807, %v806
        %v822 = vpack.c.bf16 %v809, %v808
        %v823 = vpack.c.bf16 %v811, %v810
        %v824 = vpack.c.bf16 %v813, %v812
        %v825 = vpack.c.bf16 %v815, %v814
        %v826 = vpack.c.bf16 %v817, %v816
        %v827 = vpack.c.bf16 %v819, %v818
        %v828 = vld [vmem:[%s267] sm:$0xf]
        %v829 = vld [vmem:[%s267 + $0x4] sm:$0xf]
        %v830 = vld [vmem:[%s267 + $0x8] sm:$0xf]
        %v831 = vld [vmem:[%s267 + $0xc] sm:$0xf]
        %v832 = vld [vmem:[%s267 + $0x10] sm:$0xf]
        %v833 = vld [vmem:[%s267 + $0x14] sm:$0xf]
        %v834 = vld [vmem:[%s267 + $0x18] sm:$0xf]
        %v835 = vld [vmem:[%s267 + $0x1c] sm:$0xf]
        %v840 = vunpack.c.l.b16 %v828
        %v841 = vunpack.c.l.b16 %v829
        %v842 = vunpack.c.l.b16 %v830
        %v843 = vunpack.c.l.b16 %v831
        %v844 = vpack.c.b16 %v841, %v840
        %v845 = vpack.c.b16 %v843, %v842
        %vm846 = vcmask 523264
        %v848 = vsel %vm846, %v844, 0
        %v851 = vsel %vm846, %v845, 0
        %853 = vmatprep.subr.bf16.mxu0 0
        %854 = vmatpush1.bf16.msra.mxu0 %v820
        %855 = vmatprep.subr.bf16.mxu0 0
        %856 = vmatpush1.bf16.msra.mxu0 %v821
        %857 = vmatprep.subr.bf16.mxu0 0
        %858 = vmatpush1.bf16.msra.mxu0 %v822
        %859 = vmatprep.subr.bf16.mxu0 0
        %860 = vmatpush1.bf16.msra.mxu0 %v823
        %861 = vmatprep.subr.bf16.mxu0 0
        %862 = vmatpush1.bf16.msra.mxu0 0
        %863 = vmatprep.subr.bf16.mxu0 0
        %864 = vmatpush1.bf16.msra.mxu0 0
        %865 = vmatprep.subr.bf16.mxu0 0
        %866 = vmatpush1.bf16.msra.mxu0 0
        %867 = vmatprep.subr.bf16.mxu0 0
        %868 = vmatpush1.bf16.msra.mxu0 0
        %869 = vmatprep.subr.bf16.mxu0 0
        %870 = vmatpush1.bf16.msra.mxu0 0
        %871 = vmatprep.subr.bf16.mxu0 0
        %872 = vmatpush1.bf16.msra.mxu0 0
        %873 = vmatprep.subr.bf16.mxu0 0
        %874 = vmatpush1.bf16.msra.mxu0 0
        %875 = vmatprep.subr.bf16.mxu0 0
        %876 = vmatpush1.bf16.msra.mxu0 0
        %877 = vmatprep.subr.bf16.mxu0 0
        %878 = vmatpush1.bf16.msra.mxu0 0
        %879 = vmatprep.subr.bf16.mxu0 0
        %880 = vmatpush1.bf16.msra.mxu0 0
        %881 = vmatprep.subr.bf16.mxu0 0
        %882 = vmatpush1.bf16.msra.mxu0 0
        %883 = vmatprep.subr.bf16.mxu0 0
        %884 = vmatpush1.bf16.msra.mxu0 0
        %885 = vmatprep.mubr.bf16.mxu0 0
        %886 = vmatmul.mubr.bf16.gmra.mrb[0].mxu0 %v848
        %v887 = vpop.f32.mrb[0].mxu0
        %v888 = vadd.f32 0.0, %v887
        %v889 = vpop.f32.mrb[0].mxu0
        %v890 = vpop.f32.mrb[0].mxu0
        %v891 = vadd.f32 0.0, %v890
        %v892 = vpop.f32.mrb[0].mxu0
        %893 = vmatprep.mubr.bf16.mxu0 0
        %894 = vmatmul.mubr.bf16.gmra.mrb[0].mxu0 %v851
        %v895 = vpop.f32.mrb[0].mxu0
        %v896 = vadd.f32 0.0, %v895
        %v897 = vpop.f32.mrb[0].mxu0
        %v898 = vpop.f32.mrb[0].mxu0
        %v899 = vadd.f32 0.0, %v898
        %v900 = vpop.f32.mrb[0].mxu0
        %901 = vdwg.mxu0
        %v906 = vunpack.c.l.b16 %v832
        %v907 = vunpack.c.l.b16 %v833
        %v908 = vunpack.c.l.b16 %v834
        %v909 = vunpack.c.l.b16 %v835
        %v910 = vpack.c.b16 %v907, %v906
        %v911 = vpack.c.b16 %v909, %v908
        %v913 = vsel %vm846, %v910, 0
        %v916 = vsel %vm846, %v911, 0
        %918 = vmatprep.subr.bf16.mxu0 0
        %919 = vmatpush1.bf16.msra.mxu0 %v824
        %920 = vmatprep.subr.bf16.mxu0 0
        %921 = vmatpush1.bf16.msra.mxu0 %v825
        %922 = vmatprep.subr.bf16.mxu0 0
        %923 = vmatpush1.bf16.msra.mxu0 %v826
        %924 = vmatprep.subr.bf16.mxu0 0
        %925 = vmatpush1.bf16.msra.mxu0 %v827
        %926 = vmatprep.subr.bf16.mxu0 0
        %927 = vmatpush1.bf16.msra.mxu0 0
        %928 = vmatprep.subr.bf16.mxu0 0
        %929 = vmatpush1.bf16.msra.mxu0 0
        %930 = vmatprep.subr.bf16.mxu0 0
        %931 = vmatpush1.bf16.msra.mxu0 0
        %932 = vmatprep.subr.bf16.mxu0 0
        %933 = vmatpush1.bf16.msra.mxu0 0
        %934 = vmatprep.subr.bf16.mxu0 0
        %935 = vmatpush1.bf16.msra.mxu0 0
        %936 = vmatprep.subr.bf16.mxu0 0
        %937 = vmatpush1.bf16.msra.mxu0 0
        %938 = vmatprep.subr.bf16.mxu0 0
        %939 = vmatpush1.bf16.msra.mxu0 0
        %940 = vmatprep.subr.bf16.mxu0 0
        %941 = vmatpush1.bf16.msra.mxu0 0
        %942 = vmatprep.subr.bf16.mxu0 0
        %943 = vmatpush1.bf16.msra.mxu0 0
        %944 = vmatprep.subr.bf16.mxu0 0
        %945 = vmatpush1.bf16.msra.mxu0 0
        %946 = vmatprep.subr.bf16.mxu0 0
        %947 = vmatpush1.bf16.msra.mxu0 0
        %948 = vmatprep.subr.bf16.mxu0 0
        %949 = vmatpush1.bf16.msra.mxu0 0
        %950 = vmatprep.mubr.bf16.mxu0 0
        %951 = vmatmul.mubr.bf16.gmra.mrb[0].mxu0 %v913
        %v952 = vpop.f32.mrb[0].mxu0
        %v953 = vadd.f32 0.0, %v952
        %v954 = vpop.f32.mrb[0].mxu0
        %v955 = vpop.f32.mrb[0].mxu0
        %v956 = vadd.f32 0.0, %v955
        %v957 = vpop.f32.mrb[0].mxu0
        %958 = vmatprep.mubr.bf16.mxu0 0
        %959 = vmatmul.mubr.bf16.gmra.mrb[0].mxu0 %v916
        %v960 = vpop.f32.mrb[0].mxu0
        %v961 = vadd.f32 0.0, %v960
        %v962 = vpop.f32.mrb[0].mxu0
        %v963 = vpop.f32.mrb[0].mxu0
        %v964 = vadd.f32 0.0, %v963
        %v965 = vpop.f32.mrb[0].mxu0
        %966 = vdwg.mxu0
        %v967 = vpack.c.bf16 %v891, %v888
        %v968 = vpack.c.bf16 %v956, %v953
        %v969 = vpack.c.bf16 %v899, %v896
        %v970 = vpack.c.bf16 %v964, %v961
        %v972 = vrot.slane %v310, 1
        %v974 = vld [vmem:[%s4] sm:$0xff]
        %v975 = vld [vmem:[%s4 + $0x8] sm:$0xff]
        %v976 = vld [vmem:[%s4 + $0x10] sm:$0xff]
        %v977 = vld [vmem:[%s4 + $0x18] sm:$0xff]
        %v978 = vld [vmem:[%s4 + $0x20] sm:$0xff]
        %v979 = vld [vmem:[%s4 + $0x28] sm:$0xff]
        %v980 = vld [vmem:[%s4 + $0x30] sm:$0xff]
        %v981 = vld [vmem:[%s4 + $0x38] sm:$0xff]
        %983 = vset.pattern.permute.xlu0 0
        %984 = vperm.xlu0 %983, %v974
        %v985 = vpop.permute.xlu0 %984
        %988 = vset.pattern.permute.xlu0 0
        %989 = vperm.xlu0 %988, %v975
        %v990 = vpop.permute.xlu0 %989
        %993 = vset.pattern.permute.xlu0 0
        %994 = vperm.xlu0 %993, %v976
        %v995 = vpop.permute.xlu0 %994
        %998 = vset.pattern.permute.xlu0 0
        %999 = vperm.xlu0 %998, %v977
        %v1000 = vpop.permute.xlu0 %999
        %1003 = vset.pattern.permute.xlu0 0
        %1004 = vperm.xlu0 %1003, %v978
        %v1005 = vpop.permute.xlu0 %1004
        %1008 = vset.pattern.permute.xlu0 0
        %1009 = vperm.xlu0 %1008, %v979
        %v1010 = vpop.permute.xlu0 %1009
        %1013 = vset.pattern.permute.xlu0 0
        %1014 = vperm.xlu0 %1013, %v980
        %v1015 = vpop.permute.xlu0 %1014
        %1018 = vset.pattern.permute.xlu0 0
        %1019 = vperm.xlu0 %1018, %v981
        %v1020 = vpop.permute.xlu0 %1019
        %v1022 = vlaneseq
        %v1023 = vshrl.u32 %v1022, 7
        %v1024 = vsub.s32 4, %v1023
        %v1025 = vrot.slane %v310, %v1024
        %v1026 = vlaneseq
        %v1027 = vshrl.u32 %v1026, 7
        %v1028 = vsub.s32 4, %v1027
        %v1029 = vrot.slane %v972, %v1028
        %v1030 = vmul.f32 %v985, %v1025
        %v1031 = vmul.f32 %v985, %v1029
        %v1032 = vmul.f32 %v990, %v1025
        %v1033 = vmul.f32 %v990, %v1029
        %v1034 = vmul.f32 %v995, %v1025
        %v1035 = vmul.f32 %v995, %v1029
        %v1036 = vmul.f32 %v1000, %v1025
        %v1037 = vmul.f32 %v1000, %v1029
        %v1038 = vmul.f32 %v1005, %v1025
        %v1039 = vmul.f32 %v1005, %v1029
        %v1040 = vmul.f32 %v1010, %v1025
        %v1041 = vmul.f32 %v1010, %v1029
        %v1042 = vmul.f32 %v1015, %v1025
        %v1043 = vmul.f32 %v1015, %v1029
        %v1044 = vmul.f32 %v1020, %v1025
        %v1045 = vmul.f32 %v1020, %v1029
        %1046 = vset.pattern.permute.xlu0 1
        %1047 = vperm.xlu0 %1046, %v974
        %v1048 = vpop.permute.xlu0 %1047
        %1050 = vset.pattern.permute.xlu0 1
        %1051 = vperm.xlu0 %1050, %v975
        %v1052 = vpop.permute.xlu0 %1051
        %1054 = vset.pattern.permute.xlu0 1
        %1055 = vperm.xlu0 %1054, %v976
        %v1056 = vpop.permute.xlu0 %1055
        %1058 = vset.pattern.permute.xlu0 1
        %1059 = vperm.xlu0 %1058, %v977
        %v1060 = vpop.permute.xlu0 %1059
        %1062 = vset.pattern.permute.xlu0 1
        %1063 = vperm.xlu0 %1062, %v978
        %v1064 = vpop.permute.xlu0 %1063
        %1066 = vset.pattern.permute.xlu0 1
        %1067 = vperm.xlu0 %1066, %v979
        %v1068 = vpop.permute.xlu0 %1067
        %1070 = vset.pattern.permute.xlu0 1
        %1071 = vperm.xlu0 %1070, %v980
        %v1072 = vpop.permute.xlu0 %1071
        %1074 = vset.pattern.permute.xlu0 1
        %1075 = vperm.xlu0 %1074, %v981
        %v1076 = vpop.permute.xlu0 %1075
        %v1078 = vadd.f32 %v1030, %v1048
        %v1079 = vadd.f32 %v1031, %v1048
        %v1080 = vadd.f32 %v1032, %v1052
        %v1081 = vadd.f32 %v1033, %v1052
        %v1082 = vadd.f32 %v1034, %v1056
        %v1083 = vadd.f32 %v1035, %v1056
        %v1084 = vadd.f32 %v1036, %v1060
        %v1085 = vadd.f32 %v1037, %v1060
        %v1086 = vadd.f32 %v1038, %v1064
        %v1087 = vadd.f32 %v1039, %v1064
        %v1088 = vadd.f32 %v1040, %v1068
        %v1089 = vadd.f32 %v1041, %v1068
        %v1090 = vadd.f32 %v1042, %v1072
        %v1091 = vadd.f32 %v1043, %v1072
        %v1092 = vadd.f32 %v1044, %v1076
        %v1093 = vadd.f32 %v1045, %v1076
        %v1094 = vld [vmem:[#allocation2] sm:$0xf]
        %v1095 = vld [vmem:[#allocation2 + $0x24] sm:$0xf]
        %v1096 = vld [vmem:[#allocation2 + $0x48] sm:$0xf]
        %v1097 = vld [vmem:[#allocation2 + $0x6c] sm:$0xf]
        %v1098 = vld [vmem:[#allocation2 + $0x90] sm:$0xf]
        %v1099 = vld [vmem:[#allocation2 + $0xb4] sm:$0xf]
        %v1100 = vld [vmem:[#allocation2 + $0xd8] sm:$0xf]
        %v1101 = vld [vmem:[#allocation2 + $0xfc] sm:$0xf]
        %v1110 = vunpack.c.l.b16 %v1094
        %v1111 = vunpack.c.l.b16 %v1095
        %v1112 = vunpack.c.l.b16 %v1096
        %v1113 = vunpack.c.l.b16 %v1097
        %v1114 = vunpack.c.l.b16 %v1098
        %v1115 = vunpack.c.l.b16 %v1099
        %v1116 = vunpack.c.l.b16 %v1100
        %v1117 = vunpack.c.l.b16 %v1101
        %v1118 = vpack.c.b16 %v1111, %v1110
        %v1119 = vpack.c.b16 %v1113, %v1112
        %v1120 = vpack.c.b16 %v1115, %v1114
        %v1121 = vpack.c.b16 %v1117, %v1116
        %vm1122 = vcmask 261120
        %v1124 = vsel %vm1122, %v1118, 0
        %v1127 = vsel %vm1122, %v1119, 0
        %v1130 = vsel %vm1122, %v1120, 0
        %v1133 = vsel %vm1122, %v1121, 0
        %1135 = vmatprep.subr.bf16.mxu0 %v968
        %1136 = vmatpush1.bf16.msra.mxu0 %v967
        %1137 = vmatprep.subr.bf16.mxu0 %v970
        %1138 = vmatpush1.bf16.msra.mxu0 %v969
        %1139 = vmatprep.subr.bf16.mxu0 0
        %1140 = vmatpush1.bf16.msra.mxu0 0
        %1141 = vmatprep.subr.bf16.mxu0 0
        %1142 = vmatpush1.bf16.msra.mxu0 0
        %1143 = vmatprep.subr.bf16.mxu0 0
        %1144 = vmatpush1.bf16.msra.mxu0 0
        %1145 = vmatprep.subr.bf16.mxu0 0
        %1146 = vmatpush1.bf16.msra.mxu0 0
        %1147 = vmatprep.subr.bf16.mxu0 0
        %1148 = vmatpush1.bf16.msra.mxu0 0
        %1149 = vmatprep.subr.bf16.mxu0 0
        %1150 = vmatpush1.bf16.msra.mxu0 0
        %1151 = vmatprep.subr.bf16.mxu0 0
        %1152 = vmatpush1.bf16.msra.mxu0 0
        %1153 = vmatprep.subr.bf16.mxu0 0
        %1154 = vmatpush1.bf16.msra.mxu0 0
        %1155 = vmatprep.subr.bf16.mxu0 0
        %1156 = vmatpush1.bf16.msra.mxu0 0
        %1157 = vmatprep.subr.bf16.mxu0 0
        %1158 = vmatpush1.bf16.msra.mxu0 0
        %1159 = vmatprep.subr.bf16.mxu0 0
        %1160 = vmatpush1.bf16.msra.mxu0 0
        %1161 = vmatprep.subr.bf16.mxu0 0
        %1162 = vmatpush1.bf16.msra.mxu0 0
        %1163 = vmatprep.subr.bf16.mxu0 0
        %1164 = vmatpush1.bf16.msra.mxu0 0
        %1165 = vmatprep.subr.bf16.mxu0 0
        %1166 = vmatpush1.bf16.msra.mxu0 0
        %1167 = vmatprep.mubr.bf16.mxu0 0
        %1168 = vmatmul.mubr.bf16.gmra.mrb[0].mxu0 %v1124
        %v1169 = vpop.f32.mrb[0].mxu0
        %v1170 = vadd.f32 0.0, %v1169
        %v1171 = vpop.f32.mrb[0].mxu0
        %v1172 = vadd.f32 0.0, %v1171
        %v1173 = vpop.f32.mrb[0].mxu0
        %v1174 = vadd.f32 0.0, %v1173
        %v1175 = vpop.f32.mrb[0].mxu0
        %v1176 = vadd.f32 0.0, %v1175
        %1177 = vmatprep.mubr.bf16.mxu0 0
        %1178 = vmatmul.mubr.bf16.gmra.mrb[0].mxu0 %v1127
        %v1179 = vpop.f32.mrb[0].mxu0
        %v1180 = vadd.f32 0.0, %v1179
        %v1181 = vpop.f32.mrb[0].mxu0
        %v1182 = vadd.f32 0.0, %v1181
        %v1183 = vpop.f32.mrb[0].mxu0
        %v1184 = vadd.f32 0.0, %v1183
        %v1185 = vpop.f32.mrb[0].mxu0
        %v1186 = vadd.f32 0.0, %v1185
        %1187 = vmatprep.mubr.bf16.mxu0 0
        %1188 = vmatmul.mubr.bf16.gmra.mrb[0].mxu0 %v1130
        %v1189 = vpop.f32.mrb[0].mxu0
        %v1190 = vadd.f32 0.0, %v1189
        %v1191 = vpop.f32.mrb[0].mxu0
        %v1192 = vadd.f32 0.0, %v1191
        %v1193 = vpop.f32.mrb[0].mxu0
        %v1194 = vadd.f32 0.0, %v1193
        %v1195 = vpop.f32.mrb[0].mxu0
        %v1196 = vadd.f32 0.0, %v1195
        %1197 = vmatprep.mubr.bf16.mxu0 0
        %1198 = vmatmul.mubr.bf16.gmra.mrb[0].mxu0 %v1133
        %v1199 = vpop.f32.mrb[0].mxu0
        %v1200 = vadd.f32 0.0, %v1199
        %v1201 = vpop.f32.mrb[0].mxu0
        %v1202 = vadd.f32 0.0, %v1201
        %v1203 = vpop.f32.mrb[0].mxu0
        %v1204 = vadd.f32 0.0, %v1203
        %v1205 = vpop.f32.mrb[0].mxu0
        %v1206 = vadd.f32 0.0, %v1205
        %1207 = vdwg.mxu0
        %v1208 = vadd.f32 %v1078, %v1170
        %v1209 = vadd.f32 %v1079, %v1172
        %v1210 = vadd.f32 %v1080, %v1174
        %v1211 = vadd.f32 %v1081, %v1176
        %v1212 = vadd.f32 %v1082, %v1180
        %v1213 = vadd.f32 %v1083, %v1182
        %v1214 = vadd.f32 %v1084, %v1184
        %v1215 = vadd.f32 %v1085, %v1186
        %v1216 = vadd.f32 %v1086, %v1190
        %v1217 = vadd.f32 %v1087, %v1192
        %v1218 = vadd.f32 %v1088, %v1194
        %v1219 = vadd.f32 %v1089, %v1196
        %v1220 = vadd.f32 %v1090, %v1200
        %v1221 = vadd.f32 %v1091, %v1202
        %v1222 = vadd.f32 %v1092, %v1204
        %v1223 = vadd.f32 %v1093, %v1206
        %1224 = vset.pattern.permute.xlu0 2
        %1225 = vperm.xlu0 %1224, %v974
        %v1226 = vpop.permute.xlu0 %1225
        %1228 = vset.pattern.permute.xlu0 2
        %1229 = vperm.xlu0 %1228, %v975
        %v1230 = vpop.permute.xlu0 %1229
        %1232 = vset.pattern.permute.xlu0 2
        %1233 = vperm.xlu0 %1232, %v976
        %v1234 = vpop.permute.xlu0 %1233
        %1236 = vset.pattern.permute.xlu0 2
        %1237 = vperm.xlu0 %1236, %v977
        %v1238 = vpop.permute.xlu0 %1237
        %1240 = vset.pattern.permute.xlu0 2
        %1241 = vperm.xlu0 %1240, %v978
        %v1242 = vpop.permute.xlu0 %1241
        %1244 = vset.pattern.permute.xlu0 2
        %1245 = vperm.xlu0 %1244, %v979
        %v1246 = vpop.permute.xlu0 %1245
        %1248 = vset.pattern.permute.xlu0 2
        %1249 = vperm.xlu0 %1248, %v980
        %v1250 = vpop.permute.xlu0 %1249
        %1252 = vset.pattern.permute.xlu0 2
        %1253 = vperm.xlu0 %1252, %v981
        %v1254 = vpop.permute.xlu0 %1253
        %v1256 = vadd.f32 %v1208, %v1226
        %v1257 = vadd.f32 %v1209, %v1226
        %v1258 = vadd.f32 %v1210, %v1230
        %v1259 = vadd.f32 %v1211, %v1230
        %v1260 = vadd.f32 %v1212, %v1234
        %v1261 = vadd.f32 %v1213, %v1234
        %v1262 = vadd.f32 %v1214, %v1238
        %v1263 = vadd.f32 %v1215, %v1238
        %v1264 = vadd.f32 %v1216, %v1242
        %v1265 = vadd.f32 %v1217, %v1242
        %v1266 = vadd.f32 %v1218, %v1246
        %v1267 = vadd.f32 %v1219, %v1246
        %v1268 = vadd.f32 %v1220, %v1250
        %v1269 = vadd.f32 %v1221, %v1250
        %v1270 = vadd.f32 %v1222, %v1254
        %v1271 = vadd.f32 %v1223, %v1254
        %v1272 = vld [vmem:[#allocation2 + $0x8] sm:$0xf]
        %v1273 = vld [vmem:[#allocation2 + $0x2c] sm:$0xf]
        %v1274 = vld [vmem:[#allocation2 + $0x50] sm:$0xf]
        %v1275 = vld [vmem:[#allocation2 + $0x74] sm:$0xf]
        %v1276 = vld [vmem:[#allocation2 + $0x98] sm:$0xf]
        %v1277 = vld [vmem:[#allocation2 + $0xbc] sm:$0xf]
        %v1278 = vld [vmem:[#allocation2 + $0xe0] sm:$0xf]
        %v1279 = vld [vmem:[#allocation2 + $0x104] sm:$0xf]
        %v1280 = vmax.f32 %v1256, 0.0
        %v1281 = vmax.f32 %v1257, 0.0
        %v1282 = vmax.f32 %v1258, 0.0
        %v1283 = vmax.f32 %v1259, 0.0
        %v1284 = vmax.f32 %v1260, 0.0
        %v1285 = vmax.f32 %v1261, 0.0
        %v1286 = vmax.f32 %v1262, 0.0
        %v1287 = vmax.f32 %v1263, 0.0
        %v1288 = vmax.f32 %v1264, 0.0
        %v1289 = vmax.f32 %v1265, 0.0
        %v1290 = vmax.f32 %v1266, 0.0
        %v1291 = vmax.f32 %v1267, 0.0
        %v1292 = vmax.f32 %v1268, 0.0
        %v1293 = vmax.f32 %v1269, 0.0
        %v1294 = vmax.f32 %v1270, 0.0
        %v1295 = vmax.f32 %v1271, 0.0
        %v1296 = vpack.c.bf16 %v1282, %v1280
        %v1297 = vpack.c.bf16 %v1283, %v1281
        %v1298 = vpack.c.bf16 %v1286, %v1284
        %v1299 = vpack.c.bf16 %v1287, %v1285
        %v1300 = vpack.c.bf16 %v1290, %v1288
        %v1301 = vpack.c.bf16 %v1291, %v1289
        %v1302 = vpack.c.bf16 %v1294, %v1292
        %v1303 = vpack.c.bf16 %v1295, %v1293
        %1304 = vset.pattern.permute.xlu0 4
        %1305 = vperm.xlu0 %1304, %v974
        %v1306 = vpop.permute.xlu0 %1305
        %1308 = vset.pattern.permute.xlu0 4
        %1309 = vperm.xlu0 %1308, %v975
        %v1310 = vpop.permute.xlu0 %1309
        %1312 = vset.pattern.permute.xlu0 4
        %1313 = vperm.xlu0 %1312, %v976
        %v1314 = vpop.permute.xlu0 %1313
        %1316 = vset.pattern.permute.xlu0 4
        %1317 = vperm.xlu0 %1316, %v977
        %v1318 = vpop.permute.xlu0 %1317
        %1320 = vset.pattern.permute.xlu0 4
        %1321 = vperm.xlu0 %1320, %v978
        %v1322 = vpop.permute.xlu0 %1321
        %1324 = vset.pattern.permute.xlu0 4
        %1325 = vperm.xlu0 %1324, %v979
        %v1326 = vpop.permute.xlu0 %1325
        %1328 = vset.pattern.permute.xlu0 4
        %1329 = vperm.xlu0 %1328, %v980
        %v1330 = vpop.permute.xlu0 %1329
        %1332 = vset.pattern.permute.xlu0 4
        %1333 = vperm.xlu0 %1332, %v981
        %v1334 = vpop.permute.xlu0 %1333
        %v1344 = vunpack.c.l.b16 %v1272
        %v1345 = vunpack.c.l.b16 %v1273
        %v1346 = vunpack.c.l.b16 %v1274
        %v1347 = vunpack.c.l.b16 %v1275
        %v1348 = vunpack.c.l.b16 %v1276
        %v1349 = vunpack.c.l.b16 %v1277
        %v1350 = vunpack.c.l.b16 %v1278
        %v1351 = vunpack.c.l.b16 %v1279
        %v1352 = vpack.c.b16 %v1345, %v1344
        %v1353 = vpack.c.b16 %v1347, %v1346
        %v1354 = vpack.c.b16 %v1349, %v1348
        %v1355 = vpack.c.b16 %v1351, %v1350
        %v1357 = vsel %vm846, %v1352, 0
        %v1360 = vsel %vm846, %v1353, 0
        %v1363 = vsel %vm846, %v1354, 0
        %v1366 = vsel %vm846, %v1355, 0
        %1368 = vmatprep.subr.bf16.mxu0 %v1297
        %1369 = vmatpush1.bf16.msra.mxu0 %v1296
        %1370 = vmatprep.subr.bf16.mxu0 %v1299
        %1371 = vmatpush1.bf16.msra.mxu0 %v1298
        %1372 = vmatprep.subr.bf16.mxu0 %v1301
        %1373 = vmatpush1.bf16.msra.mxu0 %v1300
        %1374 = vmatprep.subr.bf16.mxu0 %v1303
        %1375 = vmatpush1.bf16.msra.mxu0 %v1302
        %1376 = vmatprep.subr.bf16.mxu0 0
        %1377 = vmatpush1.bf16.msra.mxu0 0
        %1378 = vmatprep.subr.bf16.mxu0 0
        %1379 = vmatpush1.bf16.msra.mxu0 0
        %1380 = vmatprep.subr.bf16.mxu0 0
        %1381 = vmatpush1.bf16.msra.mxu0 0
        %1382 = vmatprep.subr.bf16.mxu0 0
        %1383 = vmatpush1.bf16.msra.mxu0 0
        %1384 = vmatprep.subr.bf16.mxu0 0
        %1385 = vmatpush1.bf16.msra.mxu0 0
        %1386 = vmatprep.subr.bf16.mxu0 0
        %1387 = vmatpush1.bf16.msra.mxu0 0
        %1388 = vmatprep.subr.bf16.mxu0 0
        %1389 = vmatpush1.bf16.msra.mxu0 0
        %1390 = vmatprep.subr.bf16.mxu0 0
        %1391 = vmatpush1.bf16.msra.mxu0 0
        %1392 = vmatprep.subr.bf16.mxu0 0
        %1393 = vmatpush1.bf16.msra.mxu0 0
        %1394 = vmatprep.subr.bf16.mxu0 0
        %1395 = vmatpush1.bf16.msra.mxu0 0
        %1396 = vmatprep.subr.bf16.mxu0 0
        %1397 = vmatpush1.bf16.msra.mxu0 0
        %1398 = vmatprep.subr.bf16.mxu0 0
        %1399 = vmatpush1.bf16.msra.mxu0 0
        %1400 = vmatprep.mubr.bf16.mxu0 0
        %1401 = vmatmul.mubr.bf16.gmra.mrb[0].mxu0 %v1357
        %v1402 = vpop.f32.mrb[0].mxu0
        %v1403 = vadd.f32 %v1306, %v1402
        %v1404 = vpop.f32.mrb[0].mxu0
        %v1405 = vadd.f32 %v1306, %v1404
        %v1406 = vpop.f32.mrb[0].mxu0
        %v1407 = vadd.f32 %v1310, %v1406
        %v1408 = vpop.f32.mrb[0].mxu0
        %v1409 = vadd.f32 %v1310, %v1408
        %1410 = vmatprep.mubr.bf16.mxu0 0
        %1411 = vmatmul.mubr.bf16.gmra.mrb[0].mxu0 %v1360
        %v1412 = vpop.f32.mrb[0].mxu0
        %v1413 = vadd.f32 %v1314, %v1412
        %v1414 = vpop.f32.mrb[0].mxu0
        %v1415 = vadd.f32 %v1314, %v1414
        %v1416 = vpop.f32.mrb[0].mxu0
        %v1417 = vadd.f32 %v1318, %v1416
        %v1418 = vpop.f32.mrb[0].mxu0
        %v1419 = vadd.f32 %v1318, %v1418
        %1420 = vmatprep.mubr.bf16.mxu0 0
        %1421 = vmatmul.mubr.bf16.gmra.mrb[0].mxu0 %v1363
        %v1422 = vpop.f32.mrb[0].mxu0
        %v1423 = vadd.f32 %v1322, %v1422
        %v1424 = vpop.f32.mrb[0].mxu0
        %v1425 = vadd.f32 %v1322, %v1424
        %v1426 = vpop.f32.mrb[0].mxu0
        %v1427 = vadd.f32 %v1326, %v1426
        %v1428 = vpop.f32.mrb[0].mxu0
        %v1429 = vadd.f32 %v1326, %v1428
        %1430 = vmatprep.mubr.bf16.mxu0 0
        %1431 = vmatmul.mubr.bf16.gmra.mrb[0].mxu0 %v1366
        %v1432 = vpop.f32.mrb[0].mxu0
        %v1433 = vadd.f32 %v1330, %v1432
        %v1434 = vpop.f32.mrb[0].mxu0
        %v1435 = vadd.f32 %v1330, %v1434
        %v1436 = vpop.f32.mrb[0].mxu0
        %v1437 = vadd.f32 %v1334, %v1436
        %v1438 = vpop.f32.mrb[0].mxu0
        %v1439 = vadd.f32 %v1334, %v1438
        %1440 = vdwg.mxu0
        %v1441 = vld [vmem:[#allocation2 + $0x14] sm:$0xf]
        %v1442 = vld [vmem:[#allocation2 + $0x38] sm:$0xf]
        %v1443 = vld [vmem:[#allocation2 + $0x5c] sm:$0xf]
        %v1444 = vld [vmem:[#allocation2 + $0x80] sm:$0xf]
        %v1445 = vld [vmem:[#allocation2 + $0xa4] sm:$0xf]
        %v1446 = vld [vmem:[#allocation2 + $0xc8] sm:$0xf]
        %v1447 = vld [vmem:[#allocation2 + $0xec] sm:$0xf]
        %v1448 = vld [vmem:[#allocation2 + $0x110] sm:$0xf]
        %v1449 = vmax.f32 %v1403, 0.0
        %v1450 = vmax.f32 %v1405, 0.0
        %v1451 = vmax.f32 %v1407, 0.0
        %v1452 = vmax.f32 %v1409, 0.0
        %v1453 = vmax.f32 %v1413, 0.0
        %v1454 = vmax.f32 %v1415, 0.0
        %v1455 = vmax.f32 %v1417, 0.0
        %v1456 = vmax.f32 %v1419, 0.0
        %v1457 = vmax.f32 %v1423, 0.0
        %v1458 = vmax.f32 %v1425, 0.0
        %v1459 = vmax.f32 %v1427, 0.0
        %v1460 = vmax.f32 %v1429, 0.0
        %v1461 = vmax.f32 %v1433, 0.0
        %v1462 = vmax.f32 %v1435, 0.0
        %v1463 = vmax.f32 %v1437, 0.0
        %v1464 = vmax.f32 %v1439, 0.0
        %v1465 = vpack.c.bf16 %v1451, %v1449
        %v1466 = vpack.c.bf16 %v1452, %v1450
        %v1467 = vpack.c.bf16 %v1455, %v1453
        %v1468 = vpack.c.bf16 %v1456, %v1454
        %v1469 = vpack.c.bf16 %v1459, %v1457
        %v1470 = vpack.c.bf16 %v1460, %v1458
        %v1471 = vpack.c.bf16 %v1463, %v1461
        %v1472 = vpack.c.bf16 %v1464, %v1462
        %1473 = vset.pattern.permute.xlu0 7
        %1474 = vperm.xlu0 %1473, %v974
        %v1475 = vpop.permute.xlu0 %1474
        %1477 = vset.pattern.permute.xlu0 7
        %1478 = vperm.xlu0 %1477, %v975
        %v1479 = vpop.permute.xlu0 %1478
        %1481 = vset.pattern.permute.xlu0 7
        %1482 = vperm.xlu0 %1481, %v976
        %v1483 = vpop.permute.xlu0 %1482
        %1485 = vset.pattern.permute.xlu0 7
        %1486 = vperm.xlu0 %1485, %v977
        %v1487 = vpop.permute.xlu0 %1486
        %1489 = vset.pattern.permute.xlu0 7
        %1490 = vperm.xlu0 %1489, %v978
        %v1491 = vpop.permute.xlu0 %1490
        %1493 = vset.pattern.permute.xlu0 7
        %1494 = vperm.xlu0 %1493, %v979
        %v1495 = vpop.permute.xlu0 %1494
        %1497 = vset.pattern.permute.xlu0 7
        %1498 = vperm.xlu0 %1497, %v980
        %v1499 = vpop.permute.xlu0 %1498
        %1501 = vset.pattern.permute.xlu0 7
        %1502 = vperm.xlu0 %1501, %v981
        %v1503 = vpop.permute.xlu0 %1502
        %v1513 = vunpack.c.l.b16 %v1441
        %v1514 = vunpack.c.l.b16 %v1442
        %v1515 = vunpack.c.l.b16 %v1443
        %v1516 = vunpack.c.l.b16 %v1444
        %v1517 = vunpack.c.l.b16 %v1445
        %v1518 = vunpack.c.l.b16 %v1446
        %v1519 = vunpack.c.l.b16 %v1447
        %v1520 = vunpack.c.l.b16 %v1448
        %v1521 = vpack.c.b16 %v1514, %v1513
        %v1522 = vpack.c.b16 %v1516, %v1515
        %v1523 = vpack.c.b16 %v1518, %v1517
        %v1524 = vpack.c.b16 %v1520, %v1519
        %v1526 = vsel %vm846, %v1521, 0
        %v1529 = vsel %vm846, %v1522, 0
        %v1532 = vsel %vm846, %v1523, 0
        %v1535 = vsel %vm846, %v1524, 0
        %1537 = vmatprep.subr.bf16.mxu0 %v1466
        %1538 = vmatpush1.bf16.msra.mxu0 %v1465
        %1539 = vmatprep.subr.bf16.mxu0 %v1468
        %1540 = vmatpush1.bf16.msra.mxu0 %v1467
        %1541 = vmatprep.subr.bf16.mxu0 %v1470
        %1542 = vmatpush1.bf16.msra.mxu0 %v1469
        %1543 = vmatprep.subr.bf16.mxu0 %v1472
        %1544 = vmatpush1.bf16.msra.mxu0 %v1471
        %1545 = vmatprep.subr.bf16.mxu0 0
        %1546 = vmatpush1.bf16.msra.mxu0 0
        %1547 = vmatprep.subr.bf16.mxu0 0
        %1548 = vmatpush1.bf16.msra.mxu0 0
        %1549 = vmatprep.subr.bf16.mxu0 0
        %1550 = vmatpush1.bf16.msra.mxu0 0
        %1551 = vmatprep.subr.bf16.mxu0 0
        %1552 = vmatpush1.bf16.msra.mxu0 0
        %1553 = vmatprep.subr.bf16.mxu0 0
        %1554 = vmatpush1.bf16.msra.mxu0 0
        %1555 = vmatprep.subr.bf16.mxu0 0
        %1556 = vmatpush1.bf16.msra.mxu0 0
        %1557 = vmatprep.subr.bf16.mxu0 0
        %1558 = vmatpush1.bf16.msra.mxu0 0
        %1559 = vmatprep.subr.bf16.mxu0 0
        %1560 = vmatpush1.bf16.msra.mxu0 0
        %1561 = vmatprep.subr.bf16.mxu0 0
        %1562 = vmatpush1.bf16.msra.mxu0 0
        %1563 = vmatprep.subr.bf16.mxu0 0
        %1564 = vmatpush1.bf16.msra.mxu0 0
        %1565 = vmatprep.subr.bf16.mxu0 0
        %1566 = vmatpush1.bf16.msra.mxu0 0
        %1567 = vmatprep.subr.bf16.mxu0 0
        %1568 = vmatpush1.bf16.msra.mxu0 0
        %1569 = vmatprep.mubr.bf16.mxu0 0
        %1570 = vmatmul.mubr.bf16.gmra.mrb[0].mxu0 %v1526
        %v1571 = vpop.f32.mrb[0].mxu0
        %v1572 = vadd.f32 %v1475, %v1571
        %v1573 = vpop.f32.mrb[0].mxu0
        %v1574 = vadd.f32 %v1475, %v1573
        %v1575 = vpop.f32.mrb[0].mxu0
        %v1576 = vadd.f32 %v1479, %v1575
        %v1577 = vpop.f32.mrb[0].mxu0
        %v1578 = vadd.f32 %v1479, %v1577
        %1579 = vmatprep.mubr.bf16.mxu0 0
        %1580 = vmatmul.mubr.bf16.gmra.mrb[0].mxu0 %v1529
        %v1581 = vpop.f32.mrb[0].mxu0
        %v1582 = vadd.f32 %v1483, %v1581
        %v1583 = vpop.f32.mrb[0].mxu0
        %v1584 = vadd.f32 %v1483, %v1583
        %v1585 = vpop.f32.mrb[0].mxu0
        %v1586 = vadd.f32 %v1487, %v1585
        %v1587 = vpop.f32.mrb[0].mxu0
        %v1588 = vadd.f32 %v1487, %v1587
        %1589 = vmatprep.mubr.bf16.mxu0 0
        %1590 = vmatmul.mubr.bf16.gmra.mrb[0].mxu0 %v1532
        %v1591 = vpop.f32.mrb[0].mxu0
        %v1592 = vadd.f32 %v1491, %v1591
        %v1593 = vpop.f32.mrb[0].mxu0
        %v1594 = vadd.f32 %v1491, %v1593
        %v1595 = vpop.f32.mrb[0].mxu0
        %v1596 = vadd.f32 %v1495, %v1595
        %v1597 = vpop.f32.mrb[0].mxu0
        %v1598 = vadd.f32 %v1495, %v1597
        %1599 = vmatprep.mubr.bf16.mxu0 0
        %1600 = vmatmul.mubr.bf16.gmra.mrb[0].mxu0 %v1535
        %v1601 = vpop.f32.mrb[0].mxu0
        %v1602 = vadd.f32 %v1499, %v1601
        %v1603 = vpop.f32.mrb[0].mxu0
        %v1604 = vadd.f32 %v1499, %v1603
        %v1605 = vpop.f32.mrb[0].mxu0
        %v1606 = vadd.f32 %v1503, %v1605
        %v1607 = vpop.f32.mrb[0].mxu0
        %v1608 = vadd.f32 %v1503, %v1607
        %1609 = vdwg.mxu0
        %v1610 = vadd.f32 %v1256, %v1572
        %v1611 = vadd.f32 %v1257, %v1574
        %v1612 = vadd.f32 %v1258, %v1576
        %v1613 = vadd.f32 %v1259, %v1578
        %v1614 = vadd.f32 %v1260, %v1582
        %v1615 = vadd.f32 %v1261, %v1584
        %v1616 = vadd.f32 %v1262, %v1586
        %v1617 = vadd.f32 %v1263, %v1588
        %v1618 = vadd.f32 %v1264, %v1592
        %v1619 = vadd.f32 %v1265, %v1594
        %v1620 = vadd.f32 %v1266, %v1596
        %v1621 = vadd.f32 %v1267, %v1598
        %v1622 = vadd.f32 %v1268, %v1602
        %v1623 = vadd.f32 %v1269, %v1604
        %v1624 = vadd.f32 %v1270, %v1606
        %v1625 = vadd.f32 %v1271, %v1608
        %v1626 = vld [vmem:[#allocation2 + $0x4] sm:$0xf]
        %v1627 = vld [vmem:[#allocation2 + $0x28] sm:$0xf]
        %v1628 = vld [vmem:[#allocation2 + $0x4c] sm:$0xf]
        %v1629 = vld [vmem:[#allocation2 + $0x70] sm:$0xf]
        %v1630 = vld [vmem:[#allocation2 + $0x94] sm:$0xf]
        %v1631 = vld [vmem:[#allocation2 + $0xb8] sm:$0xf]
        %v1632 = vld [vmem:[#allocation2 + $0xdc] sm:$0xf]
        %v1633 = vld [vmem:[#allocation2 + $0x100] sm:$0xf]
        %v1642 = vunpack.c.l.b16 %v1626
        %v1643 = vunpack.c.l.b16 %v1627
        %v1644 = vunpack.c.l.b16 %v1628
        %v1645 = vunpack.c.l.b16 %v1629
        %v1646 = vunpack.c.l.b16 %v1630
        %v1647 = vunpack.c.l.b16 %v1631
        %v1648 = vunpack.c.l.b16 %v1632
        %v1649 = vunpack.c.l.b16 %v1633
        %v1650 = vpack.c.b16 %v1643, %v1642
        %v1651 = vpack.c.b16 %v1645, %v1644
        %v1652 = vpack.c.b16 %v1647, %v1646
        %v1653 = vpack.c.b16 %v1649, %v1648
        %v1655 = vsel %vm1122, %v1650, 0
        %v1658 = vsel %vm1122, %v1651, 0
        %v1661 = vsel %vm1122, %v1652, 0
        %v1664 = vsel %vm1122, %v1653, 0
        %1666 = vmatprep.subr.bf16.mxu0 %v968
        %1667 = vmatpush1.bf16.msra.mxu0 %v967
        %1668 = vmatprep.subr.bf16.mxu0 %v970
        %1669 = vmatpush1.bf16.msra.mxu0 %v969
        %1670 = vmatprep.subr.bf16.mxu0 0
        %1671 = vmatpush1.bf16.msra.mxu0 0
        %1672 = vmatprep.subr.bf16.mxu0 0
        %1673 = vmatpush1.bf16.msra.mxu0 0
        %1674 = vmatprep.subr.bf16.mxu0 0
        %1675 = vmatpush1.bf16.msra.mxu0 0
        %1676 = vmatprep.subr.bf16.mxu0 0
        %1677 = vmatpush1.bf16.msra.mxu0 0
        %1678 = vmatprep.subr.bf16.mxu0 0
        %1679 = vmatpush1.bf16.msra.mxu0 0
        %1680 = vmatprep.subr.bf16.mxu0 0
        %1681 = vmatpush1.bf16.msra.mxu0 0
        %1682 = vmatprep.subr.bf16.mxu0 0
        %1683 = vmatpush1.bf16.msra.mxu0 0
        %1684 = vmatprep.subr.bf16.mxu0 0
        %1685 = vmatpush1.bf16.msra.mxu0 0
        %1686 = vmatprep.subr.bf16.mxu0 0
        %1687 = vmatpush1.bf16.msra.mxu0 0
        %1688 = vmatprep.subr.bf16.mxu0 0
        %1689 = vmatpush1.bf16.msra.mxu0 0
        %1690 = vmatprep.subr.bf16.mxu0 0
        %1691 = vmatpush1.bf16.msra.mxu0 0
        %1692 = vmatprep.subr.bf16.mxu0 0
        %1693 = vmatpush1.bf16.msra.mxu0 0
        %1694 = vmatprep.subr.bf16.mxu0 0
        %1695 = vmatpush1.bf16.msra.mxu0 0
        %1696 = vmatprep.subr.bf16.mxu0 0
        %1697 = vmatpush1.bf16.msra.mxu0 0
        %1698 = vmatprep.mubr.bf16.mxu0 0
        %1699 = vmatmul.mubr.bf16.gmra.mrb[0].mxu0 %v1655
        %v1700 = vpop.f32.mrb[0].mxu0
        %v1701 = vadd.f32 0.0, %v1700
        %v1702 = vpop.f32.mrb[0].mxu0
        %v1703 = vadd.f32 0.0, %v1702
        %v1704 = vpop.f32.mrb[0].mxu0
        %v1705 = vadd.f32 0.0, %v1704
        %v1706 = vpop.f32.mrb[0].mxu0
        %v1707 = vadd.f32 0.0, %v1706
        %1708 = vmatprep.mubr.bf16.mxu0 0
        %1709 = vmatmul.mubr.bf16.gmra.mrb[0].mxu0 %v1658
        %v1710 = vpop.f32.mrb[0].mxu0
        %v1711 = vadd.f32 0.0, %v1710
        %v1712 = vpop.f32.mrb[0].mxu0
        %v1713 = vadd.f32 0.0, %v1712
        %v1714 = vpop.f32.mrb[0].mxu0
        %v1715 = vadd.f32 0.0, %v1714
        %v1716 = vpop.f32.mrb[0].mxu0
        %v1717 = vadd.f32 0.0, %v1716
        %1718 = vmatprep.mubr.bf16.mxu0 0
        %1719 = vmatmul.mubr.bf16.gmra.mrb[0].mxu0 %v1661
        %v1720 = vpop.f32.mrb[0].mxu0
        %v1721 = vadd.f32 0.0, %v1720
        %v1722 = vpop.f32.mrb[0].mxu0
        %v1723 = vadd.f32 0.0, %v1722
        %v1724 = vpop.f32.mrb[0].mxu0
        %v1725 = vadd.f32 0.0, %v1724
        %v1726 = vpop.f32.mrb[0].mxu0
        %v1727 = vadd.f32 0.0, %v1726
        %1728 = vmatprep.mubr.bf16.mxu0 0
        %1729 = vmatmul.mubr.bf16.gmra.mrb[0].mxu0 %v1664
        %v1730 = vpop.f32.mrb[0].mxu0
        %v1731 = vadd.f32 0.0, %v1730
        %v1732 = vpop.f32.mrb[0].mxu0
        %v1733 = vadd.f32 0.0, %v1732
        %v1734 = vpop.f32.mrb[0].mxu0
        %v1735 = vadd.f32 0.0, %v1734
        %v1736 = vpop.f32.mrb[0].mxu0
        %v1737 = vadd.f32 0.0, %v1736
        %1738 = vdwg.mxu0
        %v1739 = vadd.f32 %v1610, %v1701
        %v1740 = vadd.f32 %v1611, %v1703
        %v1741 = vadd.f32 %v1612, %v1705
        %v1742 = vadd.f32 %v1613, %v1707
        %v1743 = vadd.f32 %v1614, %v1711
        %v1744 = vadd.f32 %v1615, %v1713
        %v1745 = vadd.f32 %v1616, %v1715
        %v1746 = vadd.f32 %v1617, %v1717
        %v1747 = vadd.f32 %v1618, %v1721
        %v1748 = vadd.f32 %v1619, %v1723
        %v1749 = vadd.f32 %v1620, %v1725
        %v1750 = vadd.f32 %v1621, %v1727
        %v1751 = vadd.f32 %v1622, %v1731
        %v1752 = vadd.f32 %v1623, %v1733
        %v1753 = vadd.f32 %v1624, %v1735
        %v1754 = vadd.f32 %v1625, %v1737
        %1755 = vset.pattern.permute.xlu0 3
        %1756 = vperm.xlu0 %1755, %v974
        %v1757 = vpop.permute.xlu0 %1756
        %1759 = vset.pattern.permute.xlu0 3
        %1760 = vperm.xlu0 %1759, %v975
        %v1761 = vpop.permute.xlu0 %1760
        %1763 = vset.pattern.permute.xlu0 3
        %1764 = vperm.xlu0 %1763, %v976
        %v1765 = vpop.permute.xlu0 %1764
        %1767 = vset.pattern.permute.xlu0 3
        %1768 = vperm.xlu0 %1767, %v977
        %v1769 = vpop.permute.xlu0 %1768
        %1771 = vset.pattern.permute.xlu0 3
        %1772 = vperm.xlu0 %1771, %v978
        %v1773 = vpop.permute.xlu0 %1772
        %1775 = vset.pattern.permute.xlu0 3
        %1776 = vperm.xlu0 %1775, %v979
        %v1777 = vpop.permute.xlu0 %1776
        %1779 = vset.pattern.permute.xlu0 3
        %1780 = vperm.xlu0 %1779, %v980
        %v1781 = vpop.permute.xlu0 %1780
        %1783 = vset.pattern.permute.xlu0 3
        %1784 = vperm.xlu0 %1783, %v981
        %v1785 = vpop.permute.xlu0 %1784
        %v1787 = vadd.f32 %v1739, %v1757
        %v1788 = vadd.f32 %v1740, %v1757
        %v1789 = vadd.f32 %v1741, %v1761
        %v1790 = vadd.f32 %v1742, %v1761
        %v1791 = vadd.f32 %v1743, %v1765
        %v1792 = vadd.f32 %v1744, %v1765
        %v1793 = vadd.f32 %v1745, %v1769
        %v1794 = vadd.f32 %v1746, %v1769
        %v1795 = vadd.f32 %v1747, %v1773
        %v1796 = vadd.f32 %v1748, %v1773
        %v1797 = vadd.f32 %v1749, %v1777
        %v1798 = vadd.f32 %v1750, %v1777
        %v1799 = vadd.f32 %v1751, %v1781
        %v1800 = vadd.f32 %v1752, %v1781
        %v1801 = vadd.f32 %v1753, %v1785
        %v1802 = vadd.f32 %v1754, %v1785
        %v1803 = vld [vmem:[#allocation2 + $0xc] sm:$0xf]
        %v1804 = vld [vmem:[#allocation2 + $0x30] sm:$0xf]
        %v1805 = vld [vmem:[#allocation2 + $0x54] sm:$0xf]
        %v1806 = vld [vmem:[#allocation2 + $0x78] sm:$0xf]
        %v1807 = vld [vmem:[#allocation2 + $0x9c] sm:$0xf]
        %v1808 = vld [vmem:[#allocation2 + $0xc0] sm:$0xf]
        %v1809 = vld [vmem:[#allocation2 + $0xe4] sm:$0xf]
        %v1810 = vld [vmem:[#allocation2 + $0x108] sm:$0xf]
        %v1811 = vmax.f32 %v1787, 0.0
        %v1812 = vmax.f32 %v1788, 0.0
        %v1813 = vmax.f32 %v1789, 0.0
        %v1814 = vmax.f32 %v1790, 0.0
        %v1815 = vmax.f32 %v1791, 0.0
        %v1816 = vmax.f32 %v1792, 0.0
        %v1817 = vmax.f32 %v1793, 0.0
        %v1818 = vmax.f32 %v1794, 0.0
        %v1819 = vmax.f32 %v1795, 0.0
        %v1820 = vmax.f32 %v1796, 0.0
        %v1821 = vmax.f32 %v1797, 0.0
        %v1822 = vmax.f32 %v1798, 0.0
        %v1823 = vmax.f32 %v1799, 0.0
        %v1824 = vmax.f32 %v1800, 0.0
        %v1825 = vmax.f32 %v1801, 0.0
        %v1826 = vmax.f32 %v1802, 0.0
        %v1827 = vpack.c.bf16 %v1813, %v1811
        %v1828 = vpack.c.bf16 %v1814, %v1812
        %v1829 = vpack.c.bf16 %v1817, %v1815
        %v1830 = vpack.c.bf16 %v1818, %v1816
        %v1831 = vpack.c.bf16 %v1821, %v1819
        %v1832 = vpack.c.bf16 %v1822, %v1820
        %v1833 = vpack.c.bf16 %v1825, %v1823
        %v1834 = vpack.c.bf16 %v1826, %v1824
        %1835 = vset.pattern.permute.xlu0 5
        %1836 = vperm.xlu0 %1835, %v974
        %v1837 = vpop.permute.xlu0 %1836
        %1839 = vset.pattern.permute.xlu0 5
        %1840 = vperm.xlu0 %1839, %v975
        %v1841 = vpop.permute.xlu0 %1840
        %1843 = vset.pattern.permute.xlu0 5
        %1844 = vperm.xlu0 %1843, %v976
        %v1845 = vpop.permute.xlu0 %1844
        %1847 = vset.pattern.permute.xlu0 5
        %1848 = vperm.xlu0 %1847, %v977
        %v1849 = vpop.permute.xlu0 %1848
        %1851 = vset.pattern.permute.xlu0 5
        %1852 = vperm.xlu0 %1851, %v978
        %v1853 = vpop.permute.xlu0 %1852
        %1855 = vset.pattern.permute.xlu0 5
        %1856 = vperm.xlu0 %1855, %v979
        %v1857 = vpop.permute.xlu0 %1856
        %1859 = vset.pattern.permute.xlu0 5
        %1860 = vperm.xlu0 %1859, %v980
        %v1861 = vpop.permute.xlu0 %1860
        %1863 = vset.pattern.permute.xlu0 5
        %1864 = vperm.xlu0 %1863, %v981
        %v1865 = vpop.permute.xlu0 %1864
        %v1875 = vunpack.c.l.b16 %v1803
        %v1876 = vunpack.c.l.b16 %v1804
        %v1877 = vunpack.c.l.b16 %v1805
        %v1878 = vunpack.c.l.b16 %v1806
        %v1879 = vunpack.c.l.b16 %v1807
        %v1880 = vunpack.c.l.b16 %v1808
        %v1881 = vunpack.c.l.b16 %v1809
        %v1882 = vunpack.c.l.b16 %v1810
        %v1883 = vpack.c.b16 %v1876, %v1875
        %v1884 = vpack.c.b16 %v1878, %v1877
        %v1885 = vpack.c.b16 %v1880, %v1879
        %v1886 = vpack.c.b16 %v1882, %v1881
        %v1888 = vsel %vm846, %v1883, 0
        %v1891 = vsel %vm846, %v1884, 0
        %v1894 = vsel %vm846, %v1885, 0
        %v1897 = vsel %vm846, %v1886, 0
        %1899 = vmatprep.subr.bf16.mxu0 %v1828
        %1900 = vmatpush1.bf16.msra.mxu0 %v1827
        %1901 = vmatprep.subr.bf16.mxu0 %v1830
        %1902 = vmatpush1.bf16.msra.mxu0 %v1829
        %1903 = vmatprep.subr.bf16.mxu0 %v1832
        %1904 = vmatpush1.bf16.msra.mxu0 %v1831
        %1905 = vmatprep.subr.bf16.mxu0 %v1834
        %1906 = vmatpush1.bf16.msra.mxu0 %v1833
        %1907 = vmatprep.subr.bf16.mxu0 0
        %1908 = vmatpush1.bf16.msra.mxu0 0
        %1909 = vmatprep.subr.bf16.mxu0 0
        %1910 = vmatpush1.bf16.msra.mxu0 0
        %1911 = vmatprep.subr.bf16.mxu0 0
        %1912 = vmatpush1.bf16.msra.mxu0 0
        %1913 = vmatprep.subr.bf16.mxu0 0
        %1914 = vmatpush1.bf16.msra.mxu0 0
        %1915 = vmatprep.subr.bf16.mxu0 0
        %1916 = vmatpush1.bf16.msra.mxu0 0
        %1917 = vmatprep.subr.bf16.mxu0 0
        %1918 = vmatpush1.bf16.msra.mxu0 0
        %1919 = vmatprep.subr.bf16.mxu0 0
        %1920 = vmatpush1.bf16.msra.mxu0 0
        %1921 = vmatprep.subr.bf16.mxu0 0
        %1922 = vmatpush1.bf16.msra.mxu0 0
        %1923 = vmatprep.subr.bf16.mxu0 0
        %1924 = vmatpush1.bf16.msra.mxu0 0
        %1925 = vmatprep.subr.bf16.mxu0 0
        %1926 = vmatpush1.bf16.msra.mxu0 0
        %1927 = vmatprep.subr.bf16.mxu0 0
        %1928 = vmatpush1.bf16.msra.mxu0 0
        %1929 = vmatprep.subr.bf16.mxu0 0
        %1930 = vmatpush1.bf16.msra.mxu0 0
        %1931 = vmatprep.mubr.bf16.mxu0 0
        %1932 = vmatmul.mubr.bf16.gmra.mrb[0].mxu0 %v1888
        %v1933 = vpop.f32.mrb[0].mxu0
        %v1934 = vadd.f32 %v1837, %v1933
        %v1935 = vpop.f32.mrb[0].mxu0
        %v1936 = vadd.f32 %v1837, %v1935
        %v1937 = vpop.f32.mrb[0].mxu0
        %v1938 = vadd.f32 %v1841, %v1937
        %v1939 = vpop.f32.mrb[0].mxu0
        %v1940 = vadd.f32 %v1841, %v1939
        %1941 = vmatprep.mubr.bf16.mxu0 0
        %1942 = vmatmul.mubr.bf16.gmra.mrb[0].mxu0 %v1891
        %v1943 = vpop.f32.mrb[0].mxu0
        %v1944 = vadd.f32 %v1845, %v1943
        %v1945 = vpop.f32.mrb[0].mxu0
        %v1946 = vadd.f32 %v1845, %v1945
        %v1947 = vpop.f32.mrb[0].mxu0
        %v1948 = vadd.f32 %v1849, %v1947
        %v1949 = vpop.f32.mrb[0].mxu0
        %v1950 = vadd.f32 %v1849, %v1949
        %1951 = vmatprep.mubr.bf16.mxu0 0
        %1952 = vmatmul.mubr.bf16.gmra.mrb[0].mxu0 %v1894
        %v1953 = vpop.f32.mrb[0].mxu0
        %v1954 = vadd.f32 %v1853, %v1953
        %v1955 = vpop.f32.mrb[0].mxu0
        %v1956 = vadd.f32 %v1853, %v1955
        %v1957 = vpop.f32.mrb[0].mxu0
        %v1958 = vadd.f32 %v1857, %v1957
        %v1959 = vpop.f32.mrb[0].mxu0
        %v1960 = vadd.f32 %v1857, %v1959
        %1961 = vmatprep.mubr.bf16.mxu0 0
        %1962 = vmatmul.mubr.bf16.gmra.mrb[0].mxu0 %v1897
        %v1963 = vpop.f32.mrb[0].mxu0
        %v1964 = vadd.f32 %v1861, %v1963
        %v1965 = vpop.f32.mrb[0].mxu0
        %v1966 = vadd.f32 %v1861, %v1965
        %v1967 = vpop.f32.mrb[0].mxu0
        %v1968 = vadd.f32 %v1865, %v1967
        %v1969 = vpop.f32.mrb[0].mxu0
        %v1970 = vadd.f32 %v1865, %v1969
        %1971 = vdwg.mxu0
        %v1972 = vld [vmem:[#allocation2 + $0x18] sm:$0xf]
        %v1973 = vld [vmem:[#allocation2 + $0x3c] sm:$0xf]
        %v1974 = vld [vmem:[#allocation2 + $0x60] sm:$0xf]
        %v1975 = vld [vmem:[#allocation2 + $0x84] sm:$0xf]
        %v1976 = vld [vmem:[#allocation2 + $0xa8] sm:$0xf]
        %v1977 = vld [vmem:[#allocation2 + $0xcc] sm:$0xf]
        %v1978 = vld [vmem:[#allocation2 + $0xf0] sm:$0xf]
        %v1979 = vld [vmem:[#allocation2 + $0x114] sm:$0xf]
        %v1980 = vmax.f32 %v1934, 0.0
        %v1981 = vmax.f32 %v1936, 0.0
        %v1982 = vmax.f32 %v1938, 0.0
        %v1983 = vmax.f32 %v1940, 0.0
        %v1984 = vmax.f32 %v1944, 0.0
        %v1985 = vmax.f32 %v1946, 0.0
        %v1986 = vmax.f32 %v1948, 0.0
        %v1987 = vmax.f32 %v1950, 0.0
        %v1988 = vmax.f32 %v1954, 0.0
        %v1989 = vmax.f32 %v1956, 0.0
        %v1990 = vmax.f32 %v1958, 0.0
        %v1991 = vmax.f32 %v1960, 0.0
        %v1992 = vmax.f32 %v1964, 0.0
        %v1993 = vmax.f32 %v1966, 0.0
        %v1994 = vmax.f32 %v1968, 0.0
        %v1995 = vmax.f32 %v1970, 0.0
        %v1996 = vpack.c.bf16 %v1982, %v1980
        %v1997 = vpack.c.bf16 %v1983, %v1981
        %v1998 = vpack.c.bf16 %v1986, %v1984
        %v1999 = vpack.c.bf16 %v1987, %v1985
        %v2000 = vpack.c.bf16 %v1990, %v1988
        %v2001 = vpack.c.bf16 %v1991, %v1989
        %v2002 = vpack.c.bf16 %v1994, %v1992
        %v2003 = vpack.c.bf16 %v1995, %v1993
        %2004 = vset.pattern.permute.xlu0 8
        %2005 = vperm.xlu0 %2004, %v974
        %v2006 = vpop.permute.xlu0 %2005
        %2008 = vset.pattern.permute.xlu0 8
        %2009 = vperm.xlu0 %2008, %v975
        %v2010 = vpop.permute.xlu0 %2009
        %2012 = vset.pattern.permute.xlu0 8
        %2013 = vperm.xlu0 %2012, %v976
        %v2014 = vpop.permute.xlu0 %2013
        %2016 = vset.pattern.permute.xlu0 8
        %2017 = vperm.xlu0 %2016, %v977
        %v2018 = vpop.permute.xlu0 %2017
        %2020 = vset.pattern.permute.xlu0 8
        %2021 = vperm.xlu0 %2020, %v978
        %v2022 = vpop.permute.xlu0 %2021
        %2024 = vset.pattern.permute.xlu0 8
        %2025 = vperm.xlu0 %2024, %v979
        %v2026 = vpop.permute.xlu0 %2025
        %2028 = vset.pattern.permute.xlu0 8
        %2029 = vperm.xlu0 %2028, %v980
        %v2030 = vpop.permute.xlu0 %2029
        %2032 = vset.pattern.permute.xlu0 8
        %2033 = vperm.xlu0 %2032, %v981
        %v2034 = vpop.permute.xlu0 %2033
        %v2044 = vunpack.c.l.b16 %v1972
        %v2045 = vunpack.c.l.b16 %v1973
        %v2046 = vunpack.c.l.b16 %v1974
        %v2047 = vunpack.c.l.b16 %v1975
        %v2048 = vunpack.c.l.b16 %v1976
        %v2049 = vunpack.c.l.b16 %v1977
        %v2050 = vunpack.c.l.b16 %v1978
        %v2051 = vunpack.c.l.b16 %v1979
        %v2052 = vpack.c.b16 %v2045, %v2044
        %v2053 = vpack.c.b16 %v2047, %v2046
        %v2054 = vpack.c.b16 %v2049, %v2048
        %v2055 = vpack.c.b16 %v2051, %v2050
        %v2057 = vsel %vm846, %v2052, 0
        %v2060 = vsel %vm846, %v2053, 0
        %v2063 = vsel %vm846, %v2054, 0
        %v2066 = vsel %vm846, %v2055, 0
        %2068 = vmatprep.subr.bf16.mxu0 %v1997
        %2069 = vmatpush1.bf16.msra.mxu0 %v1996
        %2070 = vmatprep.subr.bf16.mxu0 %v1999
        %2071 = vmatpush1.bf16.msra.mxu0 %v1998
        %2072 = vmatprep.subr.bf16.mxu0 %v2001
        %2073 = vmatpush1.bf16.msra.mxu0 %v2000
        %2074 = vmatprep.subr.bf16.mxu0 %v2003
        %2075 = vmatpush1.bf16.msra.mxu0 %v2002
        %2076 = vmatprep.subr.bf16.mxu0 0
        %2077 = vmatpush1.bf16.msra.mxu0 0
        %2078 = vmatprep.subr.bf16.mxu0 0
        %2079 = vmatpush1.bf16.msra.mxu0 0
        %2080 = vmatprep.subr.bf16.mxu0 0
        %2081 = vmatpush1.bf16.msra.mxu0 0
        %2082 = vmatprep.subr.bf16.mxu0 0
        %2083 = vmatpush1.bf16.msra.mxu0 0
        %2084 = vmatprep.subr.bf16.mxu0 0
        %2085 = vmatpush1.bf16.msra.mxu0 0
        %2086 = vmatprep.subr.bf16.mxu0 0
        %2087 = vmatpush1.bf16.msra.mxu0 0
        %2088 = vmatprep.subr.bf16.mxu0 0
        %2089 = vmatpush1.bf16.msra.mxu0 0
        %2090 = vmatprep.subr.bf16.mxu0 0
        %2091 = vmatpush1.bf16.msra.mxu0 0
        %2092 = vmatprep.subr.bf16.mxu0 0
        %2093 = vmatpush1.bf16.msra.mxu0 0
        %2094 = vmatprep.subr.bf16.mxu0 0
        %2095 = vmatpush1.bf16.msra.mxu0 0
        %2096 = vmatprep.subr.bf16.mxu0 0
        %2097 = vmatpush1.bf16.msra.mxu0 0
        %2098 = vmatprep.subr.bf16.mxu0 0
        %2099 = vmatpush1.bf16.msra.mxu0 0
        %2100 = vmatprep.mubr.bf16.mxu0 0
        %2101 = vmatmul.mubr.bf16.gmra.mrb[0].mxu0 %v2057
        %v2102 = vpop.f32.mrb[0].mxu0
        %v2103 = vadd.f32 %v2006, %v2102
        %v2104 = vpop.f32.mrb[0].mxu0
        %v2105 = vadd.f32 %v2006, %v2104
        %v2106 = vpop.f32.mrb[0].mxu0
        %v2107 = vadd.f32 %v2010, %v2106
        %v2108 = vpop.f32.mrb[0].mxu0
        %v2109 = vadd.f32 %v2010, %v2108
        %2110 = vmatprep.mubr.bf16.mxu0 0
        %2111 = vmatmul.mubr.bf16.gmra.mrb[0].mxu0 %v2060
        %v2112 = vpop.f32.mrb[0].mxu0
        %v2113 = vadd.f32 %v2014, %v2112
        %v2114 = vpop.f32.mrb[0].mxu0
        %v2115 = vadd.f32 %v2014, %v2114
        %v2116 = vpop.f32.mrb[0].mxu0
        %v2117 = vadd.f32 %v2018, %v2116
        %v2118 = vpop.f32.mrb[0].mxu0
        %v2119 = vadd.f32 %v2018, %v2118
        %2120 = vmatprep.mubr.bf16.mxu0 0
        %2121 = vmatmul.mubr.bf16.gmra.mrb[0].mxu0 %v2063
        %v2122 = vpop.f32.mrb[0].mxu0
        %v2123 = vadd.f32 %v2022, %v2122
        %v2124 = vpop.f32.mrb[0].mxu0
        %v2125 = vadd.f32 %v2022, %v2124
        %v2126 = vpop.f32.mrb[0].mxu0
        %v2127 = vadd.f32 %v2026, %v2126
        %v2128 = vpop.f32.mrb[0].mxu0
        %v2129 = vadd.f32 %v2026, %v2128
        %2130 = vmatprep.mubr.bf16.mxu0 0
        %2131 = vmatmul.mubr.bf16.gmra.mrb[0].mxu0 %v2066
        %v2132 = vpop.f32.mrb[0].mxu0
        %v2133 = vadd.f32 %v2030, %v2132
        %v2134 = vpop.f32.mrb[0].mxu0
        %v2135 = vadd.f32 %v2030, %v2134
        %v2136 = vpop.f32.mrb[0].mxu0
        %v2137 = vadd.f32 %v2034, %v2136
        %v2138 = vpop.f32.mrb[0].mxu0
        %v2139 = vadd.f32 %v2034, %v2138
        %2140 = vdwg.mxu0
        %v2141 = vadd.f32 %v1787, %v2103
        %v2142 = vadd.f32 %v1788, %v2105
        %v2143 = vadd.f32 %v1789, %v2107
        %v2144 = vadd.f32 %v1790, %v2109
        %v2145 = vadd.f32 %v1791, %v2113
        %v2146 = vadd.f32 %v1792, %v2115
        %v2147 = vadd.f32 %v1793, %v2117
        %v2148 = vadd.f32 %v1794, %v2119
        %v2149 = vadd.f32 %v1795, %v2123
        %v2150 = vadd.f32 %v1796, %v2125
        %v2151 = vadd.f32 %v1797, %v2127
        %v2152 = vadd.f32 %v1798, %v2129
        %v2153 = vadd.f32 %v1799, %v2133
        %v2154 = vadd.f32 %v1800, %v2135
        %v2155 = vadd.f32 %v1801, %v2137
        %v2156 = vadd.f32 %v1802, %v2139
        %v2157 = vadd.f32 %v2141, %v2142
        %v2158 = vadd.f32 %v2143, %v2144
        %v2159 = vadd.f32 %v2145, %v2146
        %v2160 = vadd.f32 %v2147, %v2148
        %v2161 = vadd.f32 %v2149, %v2150
        %v2162 = vadd.f32 %v2151, %v2152
        %v2163 = vadd.f32 %v2153, %v2154
        %v2164 = vadd.f32 %v2155, %v2156
        %v2165 = vmul.f32 %v2157, 0.5
        %v2166 = vmul.f32 %v2158, 0.5
        %v2167 = vmul.f32 %v2159, 0.5
        %v2168 = vmul.f32 %v2160, 0.5
        %v2169 = vmul.f32 %v2161, 0.5
        %v2170 = vmul.f32 %v2162, 0.5
        %v2171 = vmul.f32 %v2163, 0.5
        %v2172 = vmul.f32 %v2164, 0.5
        %v2173 = vld [vmem:[#allocation2 + $0x10] sm:$0xf]
        %v2174 = vld [vmem:[#allocation2 + $0x34] sm:$0xf]
        %v2175 = vld [vmem:[#allocation2 + $0x58] sm:$0xf]
        %v2176 = vld [vmem:[#allocation2 + $0x7c] sm:$0xf]
        %v2177 = vld [vmem:[#allocation2 + $0xa0] sm:$0xf]
        %v2178 = vld [vmem:[#allocation2 + $0xc4] sm:$0xf]
        %v2179 = vld [vmem:[#allocation2 + $0xe8] sm:$0xf]
        %v2180 = vld [vmem:[#allocation2 + $0x10c] sm:$0xf]
        %v2181 = vmax.f32 %v2165, 0.0
        %v2182 = vmax.f32 %v2166, 0.0
        %v2183 = vmax.f32 %v2167, 0.0
        %v2184 = vmax.f32 %v2168, 0.0
        %v2185 = vmax.f32 %v2169, 0.0
        %v2186 = vmax.f32 %v2170, 0.0
        %v2187 = vmax.f32 %v2171, 0.0
        %v2188 = vmax.f32 %v2172, 0.0
        %v2189 = vpack.c.bf16 %v2182, %v2181
        %v2190 = vpack.c.bf16 %v2184, %v2183
        %v2191 = vpack.c.bf16 %v2186, %v2185
        %v2192 = vpack.c.bf16 %v2188, %v2187
        %2193 = vset.pattern.permute.xlu0 6
        %2194 = vperm.xlu0 %2193, %v974
        %v2195 = vpop.permute.xlu0 %2194
        %2197 = vset.pattern.permute.xlu0 6
        %2198 = vperm.xlu0 %2197, %v975
        %v2199 = vpop.permute.xlu0 %2198
        %2201 = vset.pattern.permute.xlu0 6
        %2202 = vperm.xlu0 %2201, %v976
        %v2203 = vpop.permute.xlu0 %2202
        %2205 = vset.pattern.permute.xlu0 6
        %2206 = vperm.xlu0 %2205, %v977
        %v2207 = vpop.permute.xlu0 %2206
        %2209 = vset.pattern.permute.xlu0 6
        %2210 = vperm.xlu0 %2209, %v978
        %v2211 = vpop.permute.xlu0 %2210
        %2213 = vset.pattern.permute.xlu0 6
        %2214 = vperm.xlu0 %2213, %v979
        %v2215 = vpop.permute.xlu0 %2214
        %2217 = vset.pattern.permute.xlu0 6
        %2218 = vperm.xlu0 %2217, %v980
        %v2219 = vpop.permute.xlu0 %2218
        %2221 = vset.pattern.permute.xlu0 6
        %2222 = vperm.xlu0 %2221, %v981
        %v2223 = vpop.permute.xlu0 %2222
        %v2233 = vunpack.c.l.b16 %v2173
        %v2234 = vunpack.c.l.b16 %v2174
        %v2235 = vunpack.c.l.b16 %v2175
        %v2236 = vunpack.c.l.b16 %v2176
        %v2237 = vunpack.c.l.b16 %v2177
        %v2238 = vunpack.c.l.b16 %v2178
        %v2239 = vunpack.c.l.b16 %v2179
        %v2240 = vunpack.c.l.b16 %v2180
        %v2241 = vpack.c.b16 %v2234, %v2233
        %v2242 = vpack.c.b16 %v2236, %v2235
        %v2243 = vpack.c.b16 %v2238, %v2237
        %v2244 = vpack.c.b16 %v2240, %v2239
        %v2246 = vsel %vm846, %v2241, 0
        %v2249 = vsel %vm846, %v2242, 0
        %v2252 = vsel %vm846, %v2243, 0
        %v2255 = vsel %vm846, %v2244, 0
        %2257 = vmatprep.subr.bf16.mxu0 0
        %2258 = vmatpush1.bf16.msra.mxu0 %v2189
        %2259 = vmatprep.subr.bf16.mxu0 0
        %2260 = vmatpush1.bf16.msra.mxu0 %v2190
        %2261 = vmatprep.subr.bf16.mxu0 0
        %2262 = vmatpush1.bf16.msra.mxu0 %v2191
        %2263 = vmatprep.subr.bf16.mxu0 0
        %2264 = vmatpush1.bf16.msra.mxu0 %v2192
        %2265 = vmatprep.subr.bf16.mxu0 0
        %2266 = vmatpush1.bf16.msra.mxu0 0
        %2267 = vmatprep.subr.bf16.mxu0 0
        %2268 = vmatpush1.bf16.msra.mxu0 0
        %2269 = vmatprep.subr.bf16.mxu0 0
        %2270 = vmatpush1.bf16.msra.mxu0 0
        %2271 = vmatprep.subr.bf16.mxu0 0
        %2272 = vmatpush1.bf16.msra.mxu0 0
        %2273 = vmatprep.subr.bf16.mxu0 0
        %2274 = vmatpush1.bf16.msra.mxu0 0
        %2275 = vmatprep.subr.bf16.mxu0 0
        %2276 = vmatpush1.bf16.msra.mxu0 0
        %2277 = vmatprep.subr.bf16.mxu0 0
        %2278 = vmatpush1.bf16.msra.mxu0 0
        %2279 = vmatprep.subr.bf16.mxu0 0
        %2280 = vmatpush1.bf16.msra.mxu0 0
        %2281 = vmatprep.subr.bf16.mxu0 0
        %2282 = vmatpush1.bf16.msra.mxu0 0
        %2283 = vmatprep.subr.bf16.mxu0 0
        %2284 = vmatpush1.bf16.msra.mxu0 0
        %2285 = vmatprep.subr.bf16.mxu0 0
        %2286 = vmatpush1.bf16.msra.mxu0 0
        %2287 = vmatprep.subr.bf16.mxu0 0
        %2288 = vmatpush1.bf16.msra.mxu0 0
        %2289 = vmatprep.mubr.bf16.mxu0 0
        %2290 = vmatmul.mubr.bf16.gmra.mrb[0].mxu0 %v2246
        %v2291 = vpop.f32.mrb[0].mxu0
        %v2292 = vadd.f32 %v2195, %v2291
        %v2293 = vpop.f32.mrb[0].mxu0
        %v2294 = vpop.f32.mrb[0].mxu0
        %v2295 = vadd.f32 %v2199, %v2294
        %v2296 = vpop.f32.mrb[0].mxu0
        %2297 = vmatprep.mubr.bf16.mxu0 0
        %2298 = vmatmul.mubr.bf16.gmra.mrb[0].mxu0 %v2249
        %v2299 = vpop.f32.mrb[0].mxu0
        %v2300 = vadd.f32 %v2203, %v2299
        %v2301 = vpop.f32.mrb[0].mxu0
        %v2302 = vpop.f32.mrb[0].mxu0
        %v2303 = vadd.f32 %v2207, %v2302
        %v2304 = vpop.f32.mrb[0].mxu0
        %2305 = vmatprep.mubr.bf16.mxu0 0
        %2306 = vmatmul.mubr.bf16.gmra.mrb[0].mxu0 %v2252
        %v2307 = vpop.f32.mrb[0].mxu0
        %v2308 = vadd.f32 %v2211, %v2307
        %v2309 = vpop.f32.mrb[0].mxu0
        %v2310 = vpop.f32.mrb[0].mxu0
        %v2311 = vadd.f32 %v2215, %v2310
        %v2312 = vpop.f32.mrb[0].mxu0
        %2313 = vmatprep.mubr.bf16.mxu0 0
        %2314 = vmatmul.mubr.bf16.gmra.mrb[0].mxu0 %v2255
        %v2315 = vpop.f32.mrb[0].mxu0
        %v2316 = vadd.f32 %v2219, %v2315
        %v2317 = vpop.f32.mrb[0].mxu0
        %v2318 = vpop.f32.mrb[0].mxu0
        %v2319 = vadd.f32 %v2223, %v2318
        %v2320 = vpop.f32.mrb[0].mxu0
        %2321 = vdwg.mxu0
        %v2322 = vld [vmem:[#allocation2 + $0x1c] sm:$0xf]
        %v2323 = vld [vmem:[#allocation2 + $0x40] sm:$0xf]
        %v2324 = vld [vmem:[#allocation2 + $0x64] sm:$0xf]
        %v2325 = vld [vmem:[#allocation2 + $0x88] sm:$0xf]
        %v2326 = vld [vmem:[#allocation2 + $0xac] sm:$0xf]
        %v2327 = vld [vmem:[#allocation2 + $0xd0] sm:$0xf]
        %v2328 = vld [vmem:[#allocation2 + $0xf4] sm:$0xf]
        %v2329 = vld [vmem:[#allocation2 + $0x118] sm:$0xf]
        %v2330 = vmax.f32 %v2292, 0.0
        %v2331 = vmax.f32 %v2295, 0.0
        %v2332 = vmax.f32 %v2300, 0.0
        %v2333 = vmax.f32 %v2303, 0.0
        %v2334 = vmax.f32 %v2308, 0.0
        %v2335 = vmax.f32 %v2311, 0.0
        %v2336 = vmax.f32 %v2316, 0.0
        %v2337 = vmax.f32 %v2319, 0.0
        %v2338 = vpack.c.bf16 %v2331, %v2330
        %v2339 = vpack.c.bf16 %v2333, %v2332
        %v2340 = vpack.c.bf16 %v2335, %v2334
        %v2341 = vpack.c.bf16 %v2337, %v2336
        %2342 = vset.pattern.permute.xlu0 9
        %2343 = vperm.xlu0 %2342, %v974
        %v2344 = vpop.permute.xlu0 %2343
        %2346 = vset.pattern.permute.xlu0 9
        %2347 = vperm.xlu0 %2346, %v975
        %v2348 = vpop.permute.xlu0 %2347
        %2350 = vset.pattern.permute.xlu0 9
        %2351 = vperm.xlu0 %2350, %v976
        %v2352 = vpop.permute.xlu0 %2351
        %2354 = vset.pattern.permute.xlu0 9
        %2355 = vperm.xlu0 %2354, %v977
        %v2356 = vpop.permute.xlu0 %2355
        %2358 = vset.pattern.permute.xlu0 9
        %2359 = vperm.xlu0 %2358, %v978
        %v2360 = vpop.permute.xlu0 %2359
        %2362 = vset.pattern.permute.xlu0 9
        %2363 = vperm.xlu0 %2362, %v979
        %v2364 = vpop.permute.xlu0 %2363
        %2366 = vset.pattern.permute.xlu0 9
        %2367 = vperm.xlu0 %2366, %v980
        %v2368 = vpop.permute.xlu0 %2367
        %2370 = vset.pattern.permute.xlu0 9
        %2371 = vperm.xlu0 %2370, %v981
        %v2372 = vpop.permute.xlu0 %2371
        %v2382 = vunpack.c.l.b16 %v2322
        %v2383 = vunpack.c.l.b16 %v2323
        %v2384 = vunpack.c.l.b16 %v2324
        %v2385 = vunpack.c.l.b16 %v2325
        %v2386 = vunpack.c.l.b16 %v2326
        %v2387 = vunpack.c.l.b16 %v2327
        %v2388 = vunpack.c.l.b16 %v2328
        %v2389 = vunpack.c.l.b16 %v2329
        %v2390 = vpack.c.b16 %v2383, %v2382
        %v2391 = vpack.c.b16 %v2385, %v2384
        %v2392 = vpack.c.b16 %v2387, %v2386
        %v2393 = vpack.c.b16 %v2389, %v2388
        %v2395 = vsel %vm846, %v2390, 0
        %v2398 = vsel %vm846, %v2391, 0
        %v2401 = vsel %vm846, %v2392, 0
        %v2404 = vsel %vm846, %v2393, 0
        %2406 = vmatprep.subr.bf16.mxu0 0
        %2407 = vmatpush1.bf16.msra.mxu0 %v2338
        %2408 = vmatprep.subr.bf16.mxu0 0
        %2409 = vmatpush1.bf16.msra.mxu0 %v2339
        %2410 = vmatprep.subr.bf16.mxu0 0
        %2411 = vmatpush1.bf16.msra.mxu0 %v2340
        %2412 = vmatprep.subr.bf16.mxu0 0
        %2413 = vmatpush1.bf16.msra.mxu0 %v2341
        %2414 = vmatprep.subr.bf16.mxu0 0
        %2415 = vmatpush1.bf16.msra.mxu0 0
        %2416 = vmatprep.subr.bf16.mxu0 0
        %2417 = vmatpush1.bf16.msra.mxu0 0
        %2418 = vmatprep.subr.bf16.mxu0 0
        %2419 = vmatpush1.bf16.msra.mxu0 0
        %2420 = vmatprep.subr.bf16.mxu0 0
        %2421 = vmatpush1.bf16.msra.mxu0 0
        %2422 = vmatprep.subr.bf16.mxu0 0
        %2423 = vmatpush1.bf16.msra.mxu0 0
        %2424 = vmatprep.subr.bf16.mxu0 0
        %2425 = vmatpush1.bf16.msra.mxu0 0
        %2426 = vmatprep.subr.bf16.mxu0 0
        %2427 = vmatpush1.bf16.msra.mxu0 0
        %2428 = vmatprep.subr.bf16.mxu0 0
        %2429 = vmatpush1.bf16.msra.mxu0 0
        %2430 = vmatprep.subr.bf16.mxu0 0
        %2431 = vmatpush1.bf16.msra.mxu0 0
        %2432 = vmatprep.subr.bf16.mxu0 0
        %2433 = vmatpush1.bf16.msra.mxu0 0
        %2434 = vmatprep.subr.bf16.mxu0 0
        %2435 = vmatpush1.bf16.msra.mxu0 0
        %2436 = vmatprep.subr.bf16.mxu0 0
        %2437 = vmatpush1.bf16.msra.mxu0 0
        %2438 = vmatprep.mubr.bf16.mxu0 0
        %2439 = vmatmul.mubr.bf16.gmra.mrb[0].mxu0 %v2395
        %v2440 = vpop.f32.mrb[0].mxu0
        %v2441 = vadd.f32 %v2344, %v2440
        %v2442 = vpop.f32.mrb[0].mxu0
        %v2443 = vpop.f32.mrb[0].mxu0
        %v2444 = vadd.f32 %v2348, %v2443
        %v2445 = vpop.f32.mrb[0].mxu0
        %2446 = vmatprep.mubr.bf16.mxu0 0
        %2447 = vmatmul.mubr.bf16.gmra.mrb[0].mxu0 %v2398
        %v2448 = vpop.f32.mrb[0].mxu0
        %v2449 = vadd.f32 %v2352, %v2448
        %v2450 = vpop.f32.mrb[0].mxu0
        %v2451 = vpop.f32.mrb[0].mxu0
        %v2452 = vadd.f32 %v2356, %v2451
        %v2453 = vpop.f32.mrb[0].mxu0
        %2454 = vmatprep.mubr.bf16.mxu0 0
        %2455 = vmatmul.mubr.bf16.gmra.mrb[0].mxu0 %v2401
        %v2456 = vpop.f32.mrb[0].mxu0
        %v2457 = vadd.f32 %v2360, %v2456
        %v2458 = vpop.f32.mrb[0].mxu0
        %v2459 = vpop.f32.mrb[0].mxu0
        %v2460 = vadd.f32 %v2364, %v2459
        %v2461 = vpop.f32.mrb[0].mxu0
        %2462 = vmatprep.mubr.bf16.mxu0 0
        %2463 = vmatmul.mubr.bf16.gmra.mrb[0].mxu0 %v2404
        %v2464 = vpop.f32.mrb[0].mxu0
        %v2465 = vadd.f32 %v2368, %v2464
        %v2466 = vpop.f32.mrb[0].mxu0
        %v2467 = vpop.f32.mrb[0].mxu0
        %v2468 = vadd.f32 %v2372, %v2467
        %v2469 = vpop.f32.mrb[0].mxu0
        %2470 = vdwg.mxu0
        %v2471 = vadd.f32 %v2165, %v2441
        %v2472 = vadd.f32 %v2166, %v2444
        %v2473 = vadd.f32 %v2167, %v2449
        %v2474 = vadd.f32 %v2168, %v2452
        %v2475 = vadd.f32 %v2169, %v2457
        %v2476 = vadd.f32 %v2170, %v2460
        %v2477 = vadd.f32 %v2171, %v2465
        %v2478 = vadd.f32 %v2172, %v2468
        %v2479 = vld [vmem:[#allocation2 + $0x20] sm:$0xf]
        %v2480 = vld [vmem:[#allocation2 + $0x44] sm:$0xf]
        %v2481 = vld [vmem:[#allocation2 + $0x68] sm:$0xf]
        %v2482 = vld [vmem:[#allocation2 + $0x8c] sm:$0xf]
        %v2483 = vld [vmem:[#allocation2 + $0xb0] sm:$0xf]
        %v2484 = vld [vmem:[#allocation2 + $0xd4] sm:$0xf]
        %v2485 = vld [vmem:[#allocation2 + $0xf8] sm:$0xf]
        %v2486 = vld [vmem:[#allocation2 + $0x11c] sm:$0xf]
        %v2487 = vmax.f32 %v2471, 0.0
        %v2488 = vmax.f32 %v2472, 0.0
        %v2489 = vmax.f32 %v2473, 0.0
        %v2490 = vmax.f32 %v2474, 0.0
        %v2491 = vmax.f32 %v2475, 0.0
        %v2492 = vmax.f32 %v2476, 0.0
        %v2493 = vmax.f32 %v2477, 0.0
        %v2494 = vmax.f32 %v2478, 0.0
        %v2495 = vpack.c.bf16 %v2488, %v2487
        %v2496 = vpack.c.bf16 %v2490, %v2489
        %v2497 = vpack.c.bf16 %v2492, %v2491
        %v2498 = vpack.c.bf16 %v2494, %v2493
        %v2507 = vunpack.c.l.b16 %v2479
        %v2508 = vunpack.c.l.b16 %v2480
        %v2509 = vunpack.c.l.b16 %v2481
        %v2510 = vunpack.c.l.b16 %v2482
        %v2511 = vunpack.c.l.b16 %v2483
        %v2512 = vunpack.c.l.b16 %v2484
        %v2513 = vunpack.c.l.b16 %v2485
        %v2514 = vunpack.c.l.b16 %v2486
        %v2515 = vpack.c.b16 %v2508, %v2507
        %v2516 = vpack.c.b16 %v2510, %v2509
        %v2517 = vpack.c.b16 %v2512, %v2511
        %v2518 = vpack.c.b16 %v2514, %v2513
        %v2520 = vsel %vm846, %v2515, 0
        %v2523 = vsel %vm846, %v2516, 0
        %v2526 = vsel %vm846, %v2517, 0
        %v2529 = vsel %vm846, %v2518, 0
        %2531 = vmatprep.subr.bf16.mxu0 0
        %2532 = vmatpush1.bf16.msra.mxu0 %v2495
        %2533 = vmatprep.subr.bf16.mxu0 0
        %2534 = vmatpush1.bf16.msra.mxu0 %v2496
        %2535 = vmatprep.subr.bf16.mxu0 0
        %2536 = vmatpush1.bf16.msra.mxu0 %v2497
        %2537 = vmatprep.subr.bf16.mxu0 0
        %2538 = vmatpush1.bf16.msra.mxu0 %v2498
        %2539 = vmatprep.subr.bf16.mxu0 0
        %2540 = vmatpush1.bf16.msra.mxu0 0
        %2541 = vmatprep.subr.bf16.mxu0 0
        %2542 = vmatpush1.bf16.msra.mxu0 0
        %2543 = vmatprep.subr.bf16.mxu0 0
        %2544 = vmatpush1.bf16.msra.mxu0 0
        %2545 = vmatprep.subr.bf16.mxu0 0
        %2546 = vmatpush1.bf16.msra.mxu0 0
        %2547 = vmatprep.subr.bf16.mxu0 0
        %2548 = vmatpush1.bf16.msra.mxu0 0
        %2549 = vmatprep.subr.bf16.mxu0 0
        %2550 = vmatpush1.bf16.msra.mxu0 0
        %2551 = vmatprep.subr.bf16.mxu0 0
        %2552 = vmatpush1.bf16.msra.mxu0 0
        %2553 = vmatprep.subr.bf16.mxu0 0
        %2554 = vmatpush1.bf16.msra.mxu0 0
        %2555 = vmatprep.subr.bf16.mxu0 0
        %2556 = vmatpush1.bf16.msra.mxu0 0
        %2557 = vmatprep.subr.bf16.mxu0 0
        %2558 = vmatpush1.bf16.msra.mxu0 0
        %2559 = vmatprep.subr.bf16.mxu0 0
        %2560 = vmatpush1.bf16.msra.mxu0 0
        %2561 = vmatprep.subr.bf16.mxu0 0
        %2562 = vmatpush1.bf16.msra.mxu0 0
        %2563 = vmatprep.mubr.bf16.mxu0 0
        %2564 = vmatmul.mubr.bf16.gmra.mrb[0].mxu0 %v2520
        %v2565 = vpop.f32.mrb[0].mxu0
        %v2566 = vadd.f32 0.0, %v2565
        %v2567 = vpop.f32.mrb[0].mxu0
        %v2568 = vpop.f32.mrb[0].mxu0
        %v2569 = vpop.f32.mrb[0].mxu0
        %2570 = vmatprep.mubr.bf16.mxu0 0
        %2571 = vmatmul.mubr.bf16.gmra.mrb[0].mxu0 %v2523
        %v2572 = vpop.f32.mrb[0].mxu0
        %v2573 = vpop.f32.mrb[0].mxu0
        %v2574 = vpop.f32.mrb[0].mxu0
        %v2575 = vpop.f32.mrb[0].mxu0
        %2576 = vmatprep.mubr.bf16.mxu0 0
        %2577 = vmatmul.mubr.bf16.gmra.mrb[0].mxu0 %v2526
        %v2578 = vpop.f32.mrb[0].mxu0
        %v2579 = vpop.f32.mrb[0].mxu0
        %v2580 = vpop.f32.mrb[0].mxu0
        %v2581 = vpop.f32.mrb[0].mxu0
        %2582 = vmatprep.mubr.bf16.mxu0 0
        %2583 = vmatmul.mubr.bf16.gmra.mrb[0].mxu0 %v2529
        %v2584 = vpop.f32.mrb[0].mxu0
        %v2585 = vpop.f32.mrb[0].mxu0
        %v2586 = vpop.f32.mrb[0].mxu0
        %v2587 = vpop.f32.mrb[0].mxu0
        %2588 = vdwg.mxu0
        %v2589 = vld [vmem:[%s4] sm:$0xff]
        %2591 = vset.pattern.permute.xlu0 10
        %2592 = vperm.xlu0 %2591, %v2589
        %v2593 = vpop.permute.xlu0 %2592
        %v2595 = vadd.f32 %v2566, %v2593
        %vm2596 = vcmp.lt.s32.totalorder %v340, 3
        %v2597 = vxor.u32 %v2595, 2147483648
        %v2598 = vmul.f32 %v2597, 1.442695
        %v2599 = vpow.pop %v2598
        %v2600 = vadd.f32 %v2599, 1.0
        %v2601 = vrcp.pop %v2600
        %v2602 = vmul.f32 1.0, %v2601
        %v2603 = vmax.f32 %v2595, 0.0
        %v2604 = vsel %vm2596, %v2602, %v2603
        %2605 = vst [vmem:[%s271] sm:$0xff] %v2604
        %p2606 = scmp.lt.s32.totalorder %s17, 1
        %s2607 = scalar_select %p2606, %s17, 1
        %s2608 = smul.addr %s2607, 8
        %s2609 = scalar_lea.vmem %s5, %s2608
        // Predicated region
        $region45: #{pixelnerf_forward.1} parent=39 // pred_check
          %p2610 = pneg %p155
        $region46: #{pixelnerf_forward.1} parent=39 // pred_check_branch
          %2612 = sbr.rel (%p2610) target = $region48
        $region47: #{pixelnerf_forward.1} parent=39 // pred_region
          _
        $region48: #{pixelnerf_forward.1} parent=39 // pred_fallthru
          _
      $region40: #{pixelnerf_forward.1} parent=5 // pred_fallthru
        _
      %p2613 = scmp.le.s32.totalorder 2, %s12
      // Predicated region
      $region49: #{pixelnerf_forward.1} parent=5 // pred_check
        %p2614 = pneg %p2613
      $region50: #{pixelnerf_forward.1} parent=5 // pred_check_branch
        %2616 = sbr.rel (%p2614) target = $region52
      $region51: #{pixelnerf_forward.1} parent=5 // pred_region
        %s2617 = ssub.s32 %s12, 2
        // Predicated region
        $region53: #{pixelnerf_forward.1} parent=51 // pred_check
          %p2618 = pneg %p161
        $region54: #{pixelnerf_forward.1} parent=51 // pred_check_branch
          %2620 = sbr.rel (%p2618) target = $region56
        $region55: #{pixelnerf_forward.1} parent=51 // pred_region
          %p2621 = scmp.lt.s32.totalorder %s18, 1
          %s2622 = scalar_select %p2621, %s18, 1
          %s2623 = smul.addr %s2622, 8
          %s2624 = scalar_lea.vmem %s5, %s2623
        $region56: #{pixelnerf_forward.1} parent=51 // pred_fallthru
          _
      $region52: #{pixelnerf_forward.1} parent=5 // pred_fallthru
        _
    $region6: #{pixelnerf_forward.1} parent=1 // loop_footer
      %s16 = sadd.s32 1, %s12
    $region7: #{pixelnerf_forward.1} parent=1 // loop_footer_branch
      %11 = sbr.rel target = $region3
    $region8: #{pixelnerf_forward.1} parent=1 // loop_exit
      _
    %2625 = vsyncpa [#allocation3], 1
    %s2626 = scalar_lea.sflag [#allocation3], 1
    %2627 = vsyncpa %s2626, 1

</llo_original>
